<compile_context>
chip_gen: v5e
topology: v5e:2x2
jax: 0.10.0
libtpu: 0.0.40
codegen_flags: <defaults>
</compile_context>

<pallas_src>
import math

import jax
import jax.numpy as jnp
import numpy as np
from jax import lax
from jax.experimental import pallas as pl
from jax.experimental.pallas import tpu as pltpu


def _layer_norm(x, gamma, beta, eps=1e-5):
    mean = jnp.mean(x, axis=-1, keepdims=True)
    var = jnp.mean((x - mean) ** 2, axis=-1, keepdims=True)
    return (x - mean) * lax.rsqrt(var + eps) * gamma + beta


def _make_kernel(num_heads: int, ff_residual_factor: float, ffn_chunk: int,
                 q_tile: int):
    def kernel(x_ref, wqkv_ref, bqkv_ref, wo_ref, bo_ref, ln_ref,
               w1_ref, b1_ref, w2_ref, b2_ref, out_ref, kv_ref):
        T, D = x_ref.shape[1], x_ref.shape[2]
        TQ = q_tile
        dh = D // num_heads
        scale = 1.0 / math.sqrt(dh)

        ln = ln_ref[...]                        # (8, D): [g0,b0,g1,b1,g2,b2,g3,b3]

        def gamma(i):
            return ln[2 * i:2 * i + 1, :]

        def beta(i):
            return ln[2 * i + 1:2 * i + 2, :]

        # ---- K/V for the whole sequence: compute once per batch (first query
        # tile), cache as bf16 MXU operands in VMEM scratch, reuse across tiles.
        @pl.when(pl.program_id(1) == 0)
        def _():
            xf = x_ref[0]                                            # (T, D) f32
            xf_n = _layer_norm(xf, gamma(0), beta(0))
            kv = jnp.dot(xf_n.astype(jnp.bfloat16), wqkv_ref[:, D:],
                         preferred_element_type=jnp.float32) + bqkv_ref[:, D:]
            kv_ref[...] = kv.astype(jnp.bfloat16)                    # (T, 2D)

        # ---- query rows of this grid step (sliced from the resident block) ----
        qstart = pl.multiple_of(pl.program_id(1) * TQ, TQ)
        xq = x_ref[0, pl.ds(qstart, TQ), :]                          # (TQ, D) f32

        # ---------------- layer1: x + MHSA(LN(x)) ----------------
        xq_n = _layer_norm(xq, gamma(0), beta(0))
        q = (jnp.dot(xq_n.astype(jnp.bfloat16), wqkv_ref[:, :D],
                     preferred_element_type=jnp.float32) + bqkv_ref[:, :D]) * scale
        q_b = q.astype(jnp.bfloat16)                                 # (TQ, D)
        k_b = kv_ref[:, :D]                                          # (T, D) bf16
        v_b = kv_ref[:, D:]                                          # (T, D) bf16
        wo = wo_ref[...]                                             # (D, D) bf16

        attn = jnp.zeros((TQ, D), jnp.float32)
        for h in range(num_heads):                                   # static unroll
            sl = slice(h * dh, (h + 1) * dh)
            # scores: contract last dims (no explicit kh.T / XLU transpose)
            s = lax.dot_general(q_b[:, sl], k_b[:, sl],
                                (((1,), (1,)), ((), ())),
                                preferred_element_type=jnp.float32)  # (TQ, T)
            s = s - jnp.max(s, axis=-1, keepdims=True)
            p = jnp.exp(s)
            p = p * pl.reciprocal(jnp.sum(p, axis=-1, keepdims=True), approx=True)
            ctx = jnp.dot(p.astype(jnp.bfloat16), v_b[:, sl],
                          preferred_element_type=jnp.float32)        # (TQ, dh)
            # fold this head straight into the output projection (no concatenate)
            attn = attn + jnp.dot(ctx.astype(jnp.bfloat16), wo[sl, :],
                                  preferred_element_type=jnp.float32)
        attn = attn + bo_ref[...]
        x1 = xq + attn                                   # attention dropout == identity

        # ---------------- layer_norm1 ----------------
        x1 = _layer_norm(x1, gamma(1), beta(1))

        # ---------------- layer2: x + 0.5 * FFN(x), F chunked ----------------
        fn = _layer_norm(x1, gamma(2), beta(2))
        fn_b = fn.astype(jnp.bfloat16)
        F = w1_ref.shape[1]
        ff = jnp.zeros((TQ, D), jnp.float32)
        for j in range(F // ffn_chunk):                  # static unroll, caps live set
            cs = slice(j * ffn_chunk, (j + 1) * ffn_chunk)
            h1 = jnp.dot(fn_b, w1_ref[:, cs],
                         preferred_element_type=jnp.float32) + b1_ref[:, cs]
            h1 = h1 * jax.nn.sigmoid(h1)                 # Swish (f32)
            ff = ff + jnp.dot(h1.astype(jnp.bfloat16), w2_ref[cs, :],
                              preferred_element_type=jnp.float32)
        ff = ff + b2_ref[...]
        x2 = x1 + ff_residual_factor * ff                # FFN dropout == identity

        # ---------------- layer_norm2 ----------------
        out_ref[0] = _layer_norm(x2, gamma(3), beta(3)).astype(out_ref.dtype)

    return kernel


def transformer_block(x, params, *, num_heads, ff_residual_factor=0.5,
                      q_tile=None, ffn_chunk=None):
    B, T, D = x.shape
    F = params["w1"].shape[1]
    assert D % num_heads == 0
    TQ = q_tile if q_tile is not None else min(T, 128)
    FC = ffn_chunk if ffn_chunk is not None else min(F, 512)
    assert T % TQ == 0 and F % FC == 0
    NQ = T // TQ

    kernel = _make_kernel(num_heads, ff_residual_factor, FC, TQ)

    # bf16 MXU operands (weights); biases / LN params stay f32.
    wqkv = params["wqkv"].astype(jnp.bfloat16)
    wo = params["wo"].astype(jnp.bfloat16)
    w1 = params["w1"].astype(jnp.bfloat16)
    w2 = params["w2"].astype(jnp.bfloat16)

    flops = int(2 * B * T * D * (3 * D)          # QKV projections (K/V once per batch)
                + 4 * B * T * T * D              # scores + P@V over all heads
                + 2 * B * T * D * D              # output projection
                + 4 * B * T * D * F)             # FFN (two matmuls)
    transcendentals = int(B * num_heads * T * T + B * T * F)
    bytes_accessed = int(4 * 2 * B * T * D
                         + 2 * (wqkv.size + wo.size + w1.size + w2.size)
                         + 4 * (params["bqkv"].size + params["bo"].size
                                + params["ln"].size + params["b1"].size
                                + params["b2"].size))
    cost = pl.CostEstimate(flops=flops, transcendentals=transcendentals,
                           bytes_accessed=bytes_accessed)

    return pl.pallas_call(
        kernel,
        out_shape=jax.ShapeDtypeStruct((B, T, D), x.dtype),
        grid_spec=pltpu.PrefetchScalarGridSpec(
            num_scalar_prefetch=0,
            grid=(B, NQ),
            in_specs=[
                pl.BlockSpec((1, T, D), lambda b, q: (b, 0, 0)),    # full sequence
                pl.BlockSpec((D, 3 * D), lambda b, q: (0, 0)),      # Wq|Wk|Wv (bf16)
                pl.BlockSpec((1, 3 * D), lambda b, q: (0, 0)),      # bq|bk|bv
                pl.BlockSpec((D, D), lambda b, q: (0, 0)),          # Wo (bf16)
                pl.BlockSpec((1, D), lambda b, q: (0, 0)),          # bo
                pl.BlockSpec((8, D), lambda b, q: (0, 0)),          # LN gamma/beta x4
                pl.BlockSpec((D, F), lambda b, q: (0, 0)),          # FFN W1 (bf16)
                pl.BlockSpec((1, F), lambda b, q: (0, 0)),          # FFN b1
                pl.BlockSpec((F, D), lambda b, q: (0, 0)),          # FFN W2 (bf16)
                pl.BlockSpec((1, D), lambda b, q: (0, 0)),          # FFN b2
            ],
            out_specs=pl.BlockSpec((1, TQ, D), lambda b, q: (b, q, 0)),
            scratch_shapes=[pltpu.VMEM((T, 2 * D), jnp.bfloat16)],  # cached K|V
        ),
        compiler_params=pltpu.CompilerParams(
            # q axis carries the per-batch K/V scratch -> "arbitrary";
            # batch axis stays "parallel" for megacore sharding.
            dimension_semantics=("parallel", "arbitrary"),
            vmem_limit_bytes=64 * 1024 * 1024,
        ),
        cost_estimate=cost,
    )(x, wqkv, params["bqkv"], wo, params["bo"], params["ln"],
      w1, params["b1"], w2, params["b2"])


def init_params(key, D, expansion):
    F = D * expansion
    ks = jax.random.split(key, 10)
    wqkv = 0.02 * jax.random.normal(ks[0], (D, 3 * D), jnp.float32)
    bqkv = 0.02 * jax.random.normal(ks[1], (1, 3 * D), jnp.float32)
    wo = 0.02 * jax.random.normal(ks[2], (D, D), jnp.float32)
    bo = 0.02 * jax.random.normal(ks[3], (1, D), jnp.float32)
    ln_gamma = 1.0 + 0.1 * jax.random.normal(ks[4], (4, 1, D), jnp.float32)
    ln_beta = 0.05 * jax.random.normal(ks[5], (4, 1, D), jnp.float32)
    # Interleave as rows [g0, b0, g1, b1, g2, b2, g3, b3] -> (8, D).
    ln = jnp.concatenate([ln_gamma, ln_beta], axis=1).reshape(8, D)
    w1 = 0.02 * jax.random.normal(ks[6], (D, F), jnp.float32)
    b1 = 0.02 * jax.random.normal(ks[7], (1, F), jnp.float32)
    w2 = 0.02 * jax.random.normal(ks[8], (F, D), jnp.float32)
    b2 = 0.02 * jax.random.normal(ks[9], (1, D), jnp.float32)
    return dict(wqkv=wqkv, bqkv=bqkv, wo=wo, bo=bo, ln=ln,
                w1=w1, b1=b1, w2=w2, b2=b2)


def reference(x, params, num_heads, ff_residual_factor=0.5):
    """Pure-JAX f32 reference mirroring the module semantics."""
    B, T, D = x.shape
    dh = D // num_heads
    ln = params["ln"]                                  # (8, D)

    def ln_fn(y, i):
        return _layer_norm(y, ln[2 * i:2 * i + 1, :], ln[2 * i + 1:2 * i + 2, :])

    xn = ln_fn(x, 0)
    qkv = xn @ params["wqkv"] + params["bqkv"]
    q, k, v = qkv[..., :D], qkv[..., D:2 * D], qkv[..., 2 * D:]
    q = q.reshape(B, T, num_heads, dh).transpose(0, 2, 1, 3)
    k = k.reshape(B, T, num_heads, dh).transpose(0, 2, 1, 3)
    v = v.reshape(B, T, num_heads, dh).transpose(0, 2, 1, 3)
    s = jnp.einsum("bhqd,bhkd->bhqk", q, k) / math.sqrt(dh)
    p = jax.nn.softmax(s, axis=-1)
    ctx = jnp.einsum("bhqk,bhkd->bhqd", p, v).transpose(0, 2, 1, 3).reshape(B, T, D)
    attn = ctx @ params["wo"] + params["bo"]
    x1 = ln_fn(x + attn, 1)
    fn = ln_fn(x1, 2)
    h1 = fn @ params["w1"] + params["b1"]
    h1 = h1 * jax.nn.sigmoid(h1)
    ff = h1 @ params["w2"] + params["b2"]
    x2 = x1 + ff_residual_factor * ff
    return ln_fn(x2, 3)


if __name__ == "__main__":
    # Small but lane/sublane-aligned shapes: encoder_dim=128, 4 heads, expansion=4.
    B, T, D, HEADS, EXPANSION = 2, 16, 128, 4, 4
    key = jax.random.PRNGKey(0)
    kx, kp = jax.random.split(key)
    x = jax.random.normal(kx, (B, T, D), jnp.float32)
    params = init_params(kp, D, EXPANSION)

    out = transformer_block(x, params, num_heads=HEADS, ff_residual_factor=0.5,
                            q_tile=8, ffn_chunk=256)
    out = jax.block_until_ready(out)

    ref = reference(x, params, HEADS, 0.5)
    # bf16 MXU operands + approx reciprocal -> compare against f32 reference
    # with loosened tolerances.
    np.testing.assert_allclose(np.asarray(out), np.asarray(ref), rtol=2e-2, atol=2e-2)
    print("KERNEL_OK")
</pallas_src>

<mosaic_0001>
module attributes {stable_mosaic.version = 11 : i64} {
  func.func @kernel(%arg0: i32, %arg1: i32, %arg2: memref<1x16x128xf32, #tpu.memory_space<vmem>>, %arg3: memref<128x384xbf16, #tpu.memory_space<vmem>>, %arg4: memref<1x384xf32, #tpu.memory_space<vmem>>, %arg5: memref<128x128xbf16, #tpu.memory_space<vmem>>, %arg6: memref<1x128xf32, #tpu.memory_space<vmem>>, %arg7: memref<8x128xf32, #tpu.memory_space<vmem>>, %arg8: memref<128x512xbf16, #tpu.memory_space<vmem>>, %arg9: memref<1x512xf32, #tpu.memory_space<vmem>>, %arg10: memref<512x128xbf16, #tpu.memory_space<vmem>>, %arg11: memref<1x128xf32, #tpu.memory_space<vmem>>, %arg12: memref<1x8x128xf32, #tpu.memory_space<vmem>>, %arg13: memref<16x256xbf16, #tpu.memory_space<vmem>>) attributes {dimension_semantics = [#tpu.dimension_semantics<parallel>, #tpu.dimension_semantics<arbitrary>], iteration_bounds = array<i64: 2, 2>, scalar_prefetch = 0 : i64, scratch_operands = 1 : i64, tpu.core_type = #tpu.core_type<tc>, window_params = [{transform_indices = @transform_0, window_bounds = array<i64: 1, 16, 128>}, {pipeline_mode = #tpu.pipeline_mode<synchronous>, transform_indices = @transform_1, window_bounds = array<i64: 128, 384>}, {pipeline_mode = #tpu.pipeline_mode<synchronous>, transform_indices = @transform_2, window_bounds = array<i64: 1, 384>}, {pipeline_mode = #tpu.pipeline_mode<synchronous>, transform_indices = @transform_3, window_bounds = array<i64: 128, 128>}, {pipeline_mode = #tpu.pipeline_mode<synchronous>, transform_indices = @transform_4, window_bounds = array<i64: 1, 128>}, {pipeline_mode = #tpu.pipeline_mode<synchronous>, transform_indices = @transform_5, window_bounds = array<i64: 8, 128>}, {pipeline_mode = #tpu.pipeline_mode<synchronous>, transform_indices = @transform_6, window_bounds = array<i64: 128, 512>}, {pipeline_mode = #tpu.pipeline_mode<synchronous>, transform_indices = @transform_7, window_bounds = array<i64: 1, 512>}, {pipeline_mode = #tpu.pipeline_mode<synchronous>, transform_indices = @transform_8, window_bounds = array<i64: 512, 128>}, {pipeline_mode = #tpu.pipeline_mode<synchronous>, transform_indices = @transform_9, window_bounds = array<i64: 1, 128>}, {transform_indices = @transform_10, window_bounds = array<i64: 1, 8, 128>}]} {
    %c0 = arith.constant 0 : index
    %c0_0 = arith.constant 0 : index
    %0 = vector.load %arg7[%c0, %c0_0] : memref<8x128xf32, #tpu.memory_space<vmem>>, vector<8x128xf32>
    %c0_i32 = arith.constant 0 : i32
    %1 = arith.cmpi eq, %arg1, %c0_i32 : i32
    %2 = arith.extui %1 : i1 to i32
    %c0_i32_1 = arith.constant 0 : i32
    %3 = arith.cmpi ne, %2, %c0_i32_1 : i32
    scf.if %3 {
      %c0_81 = arith.constant 0 : index
      %c0_82 = arith.constant 0 : index
      %c0_83 = arith.constant 0 : index
      %243 = vector.load %arg2[%c0_81, %c0_82, %c0_83] : memref<1x16x128xf32, #tpu.memory_space<vmem>>, vector<1x16x128xf32>
      %244 = vector.shape_cast %243 : vector<1x16x128xf32> to vector<16x128xf32>
      %245 = vector.extract_strided_slice %0 {offsets = [0, 0], sizes = [1, 128], strides = [1, 1]} : vector<8x128xf32> to vector<1x128xf32>
      %246 = vector.extract_strided_slice %0 {offsets = [1, 0], sizes = [1, 128], strides = [1, 1]} : vector<8x128xf32> to vector<1x128xf32>
      %cst_84 = arith.constant dense<0.000000e+00> : vector<16xf32>
      %247 = vector.multi_reduction <add>, %244, %cst_84 [1] : vector<16x128xf32> to vector<16xf32>
      %248 = vector.shape_cast %247 : vector<16xf32> to vector<16x1xf32>
      %cst_85 = arith.constant 1.280000e+02 : f32
      %249 = vector.broadcast %cst_85 : f32 to vector<16x1xf32>
      %250 = arith.divf %248, %249 : vector<16x1xf32>
      %251 = vector.broadcast %250 : vector<16x1xf32> to vector<16x128xf32>
      %252 = arith.subf %244, %251 : vector<16x128xf32>
      %253 = arith.mulf %252, %252 : vector<16x128xf32>
      %cst_86 = arith.constant dense<0.000000e+00> : vector<16xf32>
      %254 = vector.multi_reduction <add>, %253, %cst_86 [1] : vector<16x128xf32> to vector<16xf32>
      %255 = vector.shape_cast %254 : vector<16xf32> to vector<16x1xf32>
      %cst_87 = arith.constant 1.280000e+02 : f32
      %256 = vector.broadcast %cst_87 : f32 to vector<16x1xf32>
      %257 = arith.divf %255, %256 : vector<16x1xf32>
      %258 = vector.broadcast %250 : vector<16x1xf32> to vector<16x128xf32>
      %259 = arith.subf %244, %258 : vector<16x128xf32>
      %cst_88 = arith.constant 9.99999974E-6 : f32
      %260 = vector.broadcast %cst_88 : f32 to vector<16x1xf32>
      %261 = arith.addf %257, %260 : vector<16x1xf32>
      %262 = math.rsqrt %261 : vector<16x1xf32>
      %263 = vector.broadcast %262 : vector<16x1xf32> to vector<16x128xf32>
      %264 = arith.mulf %259, %263 : vector<16x128xf32>
      %265 = vector.broadcast %245 : vector<1x128xf32> to vector<16x128xf32>
      %266 = arith.mulf %264, %265 : vector<16x128xf32>
      %267 = vector.broadcast %246 : vector<1x128xf32> to vector<16x128xf32>
      %268 = arith.addf %266, %267 : vector<16x128xf32>
      %269 = arith.truncf %268 : vector<16x128xf32> to vector<16x128xbf16>
      %c0_89 = arith.constant 0 : index
      %c128_90 = arith.constant 128 : index
      %270 = vector.load %arg3[%c0_89, %c128_90] : memref<128x384xbf16, #tpu.memory_space<vmem>>, vector<128x256xbf16>
      %cst_91 = arith.constant dense<0.000000e+00> : vector<16x256xf32>
      %271 = tpu.matmul %269, %270, %cst_91 {dimension_numbers = #tpu.dot_dimension_numbers<[1], [0], [0], [1], [0, 0, 1, 1], [], []>} : vector<16x128xbf16>, vector<128x256xbf16>, vector<16x256xf32> -> vector<16x256xf32>
      %c0_92 = arith.constant 0 : index
      %c128_93 = arith.constant 128 : index
      %272 = vector.load %arg4[%c0_92, %c128_93] : memref<1x384xf32, #tpu.memory_space<vmem>>, vector<1x256xf32>
      %273 = vector.broadcast %272 : vector<1x256xf32> to vector<16x256xf32>
      %274 = arith.addf %271, %273 : vector<16x256xf32>
      %275 = arith.truncf %274 : vector<16x256xf32> to vector<16x256xbf16>
      %c0_94 = arith.constant 0 : index
      %c0_95 = arith.constant 0 : index
      %276 = vector.load %arg13[%c0_94, %c0_95] : memref<16x256xbf16, #tpu.memory_space<vmem>>, vector<16x256xbf16>
      tpu.vector_store %arg13[%c0_94, %c0_95], %275 {strides = array<i32>} : memref<16x256xbf16, #tpu.memory_space<vmem>>, vector<16x256xbf16>,
    } else {
    }
    %c8_i32 = arith.constant 8 : i32
    %4 = arith.muli %arg1, %c8_i32 : i32
    %5 = tpu.assume_multiple %4, 8 : i32
    %c0_2 = arith.constant 0 : index
    %6 = arith.index_cast %5 : i32 to index
    %c0_3 = arith.constant 0 : index
    %7 = vector.load %arg2[%c0_2, %6, %c0_3] : memref<1x16x128xf32, #tpu.memory_space<vmem>>, vector<1x8x128xf32>
    %8 = vector.shape_cast %7 : vector<1x8x128xf32> to vector<8x128xf32>
    %9 = vector.extract_strided_slice %0 {offsets = [0, 0], sizes = [1, 128], strides = [1, 1]} : vector<8x128xf32> to vector<1x128xf32>
    %10 = vector.extract_strided_slice %0 {offsets = [1, 0], sizes = [1, 128], strides = [1, 1]} : vector<8x128xf32> to vector<1x128xf32>
    %cst = arith.constant dense<0.000000e+00> : vector<8xf32>
    %11 = vector.multi_reduction <add>, %8, %cst [1] : vector<8x128xf32> to vector<8xf32>
    %12 = vector.shape_cast %11 : vector<8xf32> to vector<8x1xf32>
    %cst_4 = arith.constant 1.280000e+02 : f32
    %13 = vector.broadcast %cst_4 : f32 to vector<8x1xf32>
    %14 = arith.divf %12, %13 : vector<8x1xf32>
    %15 = vector.broadcast %14 : vector<8x1xf32> to vector<8x128xf32>
    %16 = arith.subf %8, %15 : vector<8x128xf32>
    %17 = arith.mulf %16, %16 : vector<8x128xf32>
    %cst_5 = arith.constant dense<0.000000e+00> : vector<8xf32>
    %18 = vector.multi_reduction <add>, %17, %cst_5 [1] : vector<8x128xf32> to vector<8xf32>
    %19 = vector.shape_cast %18 : vector<8xf32> to vector<8x1xf32>
    %cst_6 = arith.constant 1.280000e+02 : f32
    %20 = vector.broadcast %cst_6 : f32 to vector<8x1xf32>
    %21 = arith.divf %19, %20 : vector<8x1xf32>
    %22 = vector.broadcast %14 : vector<8x1xf32> to vector<8x128xf32>
    %23 = arith.subf %8, %22 : vector<8x128xf32>
    %cst_7 = arith.constant 9.99999974E-6 : f32
    %24 = vector.broadcast %cst_7 : f32 to vector<8x1xf32>
    %25 = arith.addf %21, %24 : vector<8x1xf32>
    %26 = math.rsqrt %25 : vector<8x1xf32>
    %27 = vector.broadcast %26 : vector<8x1xf32> to vector<8x128xf32>
    %28 = arith.mulf %23, %27 : vector<8x128xf32>
    %29 = vector.broadcast %9 : vector<1x128xf32> to vector<8x128xf32>
    %30 = arith.mulf %28, %29 : vector<8x128xf32>
    %31 = vector.broadcast %10 : vector<1x128xf32> to vector<8x128xf32>
    %32 = arith.addf %30, %31 : vector<8x128xf32>
    %33 = arith.truncf %32 : vector<8x128xf32> to vector<8x128xbf16>
    %c0_8 = arith.constant 0 : index
    %c0_9 = arith.constant 0 : index
    %34 = vector.load %arg3[%c0_8, %c0_9] : memref<128x384xbf16, #tpu.memory_space<vmem>>, vector<128x128xbf16>
    %cst_10 = arith.constant dense<0.000000e+00> : vector<8x128xf32>
    %35 = tpu.matmul %33, %34, %cst_10 {dimension_numbers = #tpu.dot_dimension_numbers<[1], [0], [0], [1], [0, 0, 1, 1], [], []>} : vector<8x128xbf16>, vector<128x128xbf16>, vector<8x128xf32> -> vector<8x128xf32>
    %c0_11 = arith.constant 0 : index
    %c0_12 = arith.constant 0 : index
    %36 = vector.load %arg4[%c0_11, %c0_12] : memref<1x384xf32, #tpu.memory_space<vmem>>, vector<1x128xf32>
    %37 = vector.broadcast %36 : vector<1x128xf32> to vector<8x128xf32>
    %38 = arith.addf %35, %37 : vector<8x128xf32>
    %cst_13 = arith.constant 0.176776692 : f32
    %39 = vector.broadcast %cst_13 : f32 to vector<8x128xf32>
    %40 = arith.mulf %38, %39 : vector<8x128xf32>
    %41 = arith.truncf %40 : vector<8x128xf32> to vector<8x128xbf16>
    %c0_14 = arith.constant 0 : index
    %c0_15 = arith.constant 0 : index
    %42 = vector.load %arg13[%c0_14, %c0_15] : memref<16x256xbf16, #tpu.memory_space<vmem>>, vector<16x128xbf16>
    %c0_16 = arith.constant 0 : index
    %c128 = arith.constant 128 : index
    %43 = vector.load %arg13[%c0_16, %c128] : memref<16x256xbf16, #tpu.memory_space<vmem>>, vector<16x128xbf16>
    %c0_17 = arith.constant 0 : index
    %c0_18 = arith.constant 0 : index
    %44 = vector.load %arg5[%c0_17, %c0_18] : memref<128x128xbf16, #tpu.memory_space<vmem>>, vector<128x128xbf16>
    %cst_19 = arith.constant 0.000000e+00 : f32
    %45 = vector.broadcast %cst_19 : f32 to vector<8x128xf32>
    %46 = vector.extract_strided_slice %41 {offsets = [0, 0], sizes = [8, 32], strides = [1, 1]} : vector<8x128xbf16> to vector<8x32xbf16>
    %47 = vector.extract_strided_slice %42 {offsets = [0, 0], sizes = [16, 32], strides = [1, 1]} : vector<16x128xbf16> to vector<16x32xbf16>
    %cst_20 = arith.constant dense<0.000000e+00> : vector<8x16xf32>
    %48 = tpu.matmul %46, %47, %cst_20 {dimension_numbers = #tpu.dot_dimension_numbers<[1], [1], [0], [0], [0, 0, 1, 0], [], []>} : vector<8x32xbf16>, vector<16x32xbf16>, vector<8x16xf32> -> vector<8x16xf32>
    %cst_21 = arith.constant dense<0xFF800000> : vector<8xf32>
    %49 = vector.multi_reduction <maximumf>, %48, %cst_21 [1] : vector<8x16xf32> to vector<8xf32>
    %50 = vector.shape_cast %49 : vector<8xf32> to vector<8x1xf32>
    %51 = vector.broadcast %50 : vector<8x1xf32> to vector<8x16xf32>
    %52 = arith.subf %48, %51 : vector<8x16xf32>
    %53 = math.exp %52 : vector<8x16xf32>
    %cst_22 = arith.constant dense<0.000000e+00> : vector<8xf32>
    %54 = vector.multi_reduction <add>, %53, %cst_22 [1] : vector<8x16xf32> to vector<8xf32>
    %55 = vector.shape_cast %54 : vector<8xf32> to vector<8x1xf32>
    %56 = tpu.reciprocal %55 {approx = true} : vector<8x1xf32> -> vector<8x1xf32>
    %57 = vector.broadcast %56 : vector<8x1xf32> to vector<8x16xf32>
    %58 = arith.mulf %53, %57 : vector<8x16xf32>
    %59 = arith.truncf %58 : vector<8x16xf32> to vector<8x16xbf16>
    %60 = vector.extract_strided_slice %43 {offsets = [0, 0], sizes = [16, 32], strides = [1, 1]} : vector<16x128xbf16> to vector<16x32xbf16>
    %cst_23 = arith.constant dense<0.000000e+00> : vector<8x32xf32>
    %61 = tpu.matmul %59, %60, %cst_23 {dimension_numbers = #tpu.dot_dimension_numbers<[1], [0], [0], [1], [0, 0, 1, 1], [], []>} : vector<8x16xbf16>, vector<16x32xbf16>, vector<8x32xf32> -> vector<8x32xf32>
    %62 = arith.truncf %61 : vector<8x32xf32> to vector<8x32xbf16>
    %63 = vector.extract_strided_slice %44 {offsets = [0, 0], sizes = [32, 128], strides = [1, 1]} : vector<128x128xbf16> to vector<32x128xbf16>
    %cst_24 = arith.constant dense<0.000000e+00> : vector<8x128xf32>
    %64 = tpu.matmul %62, %63, %cst_24 {dimension_numbers = #tpu.dot_dimension_numbers<[1], [0], [0], [1], [0, 0, 1, 1], [], []>} : vector<8x32xbf16>, vector<32x128xbf16>, vector<8x128xf32> -> vector<8x128xf32>
    %65 = arith.addf %45, %64 : vector<8x128xf32>
    %66 = vector.extract_strided_slice %41 {offsets = [0, 32], sizes = [8, 32], strides = [1, 1]} : vector<8x128xbf16> to vector<8x32xbf16>
    %67 = vector.extract_strided_slice %42 {offsets = [0, 32], sizes = [16, 32], strides = [1, 1]} : vector<16x128xbf16> to vector<16x32xbf16>
    %cst_25 = arith.constant dense<0.000000e+00> : vector<8x16xf32>
    %68 = tpu.matmul %66, %67, %cst_25 {dimension_numbers = #tpu.dot_dimension_numbers<[1], [1], [0], [0], [0, 0, 1, 0], [], []>} : vector<8x32xbf16>, vector<16x32xbf16>, vector<8x16xf32> -> vector<8x16xf32>
    %cst_26 = arith.constant dense<0xFF800000> : vector<8xf32>
    %69 = vector.multi_reduction <maximumf>, %68, %cst_26 [1] : vector<8x16xf32> to vector<8xf32>
    %70 = vector.shape_cast %69 : vector<8xf32> to vector<8x1xf32>
    %71 = vector.broadcast %70 : vector<8x1xf32> to vector<8x16xf32>
    %72 = arith.subf %68, %71 : vector<8x16xf32>
    %73 = math.exp %72 : vector<8x16xf32>
    %cst_27 = arith.constant dense<0.000000e+00> : vector<8xf32>
    %74 = vector.multi_reduction <add>, %73, %cst_27 [1] : vector<8x16xf32> to vector<8xf32>
    %75 = vector.shape_cast %74 : vector<8xf32> to vector<8x1xf32>
    %76 = tpu.reciprocal %75 {approx = true} : vector<8x1xf32> -> vector<8x1xf32>
    %77 = vector.broadcast %76 : vector<8x1xf32> to vector<8x16xf32>
    %78 = arith.mulf %73, %77 : vector<8x16xf32>
    %79 = arith.truncf %78 : vector<8x16xf32> to vector<8x16xbf16>
    %80 = vector.extract_strided_slice %43 {offsets = [0, 32], sizes = [16, 32], strides = [1, 1]} : vector<16x128xbf16> to vector<16x32xbf16>
    %cst_28 = arith.constant dense<0.000000e+00> : vector<8x32xf32>
    %81 = tpu.matmul %79, %80, %cst_28 {dimension_numbers = #tpu.dot_dimension_numbers<[1], [0], [0], [1], [0, 0, 1, 1], [], []>} : vector<8x16xbf16>, vector<16x32xbf16>, vector<8x32xf32> -> vector<8x32xf32>
    %82 = arith.truncf %81 : vector<8x32xf32> to vector<8x32xbf16>
    %83 = vector.extract_strided_slice %44 {offsets = [32, 0], sizes = [32, 128], strides = [1, 1]} : vector<128x128xbf16> to vector<32x128xbf16>
    %cst_29 = arith.constant dense<0.000000e+00> : vector<8x128xf32>
    %84 = tpu.matmul %82, %83, %cst_29 {dimension_numbers = #tpu.dot_dimension_numbers<[1], [0], [0], [1], [0, 0, 1, 1], [], []>} : vector<8x32xbf16>, vector<32x128xbf16>, vector<8x128xf32> -> vector<8x128xf32>
    %85 = arith.addf %65, %84 : vector<8x128xf32>
    %86 = vector.extract_strided_slice %41 {offsets = [0, 64], sizes = [8, 32], strides = [1, 1]} : vector<8x128xbf16> to vector<8x32xbf16>
    %87 = vector.extract_strided_slice %42 {offsets = [0, 64], sizes = [16, 32], strides = [1, 1]} : vector<16x128xbf16> to vector<16x32xbf16>
    %cst_30 = arith.constant dense<0.000000e+00> : vector<8x16xf32>
    %88 = tpu.matmul %86, %87, %cst_30 {dimension_numbers = #tpu.dot_dimension_numbers<[1], [1], [0], [0], [0, 0, 1, 0], [], []>} : vector<8x32xbf16>, vector<16x32xbf16>, vector<8x16xf32> -> vector<8x16xf32>
    %cst_31 = arith.constant dense<0xFF800000> : vector<8xf32>
    %89 = vector.multi_reduction <maximumf>, %88, %cst_31 [1] : vector<8x16xf32> to vector<8xf32>
    %90 = vector.shape_cast %89 : vector<8xf32> to vector<8x1xf32>
    %91 = vector.broadcast %90 : vector<8x1xf32> to vector<8x16xf32>
    %92 = arith.subf %88, %91 : vector<8x16xf32>
    %93 = math.exp %92 : vector<8x16xf32>
    %cst_32 = arith.constant dense<0.000000e+00> : vector<8xf32>
    %94 = vector.multi_reduction <add>, %93, %cst_32 [1] : vector<8x16xf32> to vector<8xf32>
    %95 = vector.shape_cast %94 : vector<8xf32> to vector<8x1xf32>
    %96 = tpu.reciprocal %95 {approx = true} : vector<8x1xf32> -> vector<8x1xf32>
    %97 = vector.broadcast %96 : vector<8x1xf32> to vector<8x16xf32>
    %98 = arith.mulf %93, %97 : vector<8x16xf32>
    %99 = arith.truncf %98 : vector<8x16xf32> to vector<8x16xbf16>
    %100 = vector.extract_strided_slice %43 {offsets = [0, 64], sizes = [16, 32], strides = [1, 1]} : vector<16x128xbf16> to vector<16x32xbf16>
    %cst_33 = arith.constant dense<0.000000e+00> : vector<8x32xf32>
    %101 = tpu.matmul %99, %100, %cst_33 {dimension_numbers = #tpu.dot_dimension_numbers<[1], [0], [0], [1], [0, 0, 1, 1], [], []>} : vector<8x16xbf16>, vector<16x32xbf16>, vector<8x32xf32> -> vector<8x32xf32>
    %102 = arith.truncf %101 : vector<8x32xf32> to vector<8x32xbf16>
    %103 = vector.extract_strided_slice %44 {offsets = [64, 0], sizes = [32, 128], strides = [1, 1]} : vector<128x128xbf16> to vector<32x128xbf16>
    %cst_34 = arith.constant dense<0.000000e+00> : vector<8x128xf32>
    %104 = tpu.matmul %102, %103, %cst_34 {dimension_numbers = #tpu.dot_dimension_numbers<[1], [0], [0], [1], [0, 0, 1, 1], [], []>} : vector<8x32xbf16>, vector<32x128xbf16>, vector<8x128xf32> -> vector<8x128xf32>
    %105 = arith.addf %85, %104 : vector<8x128xf32>
    %106 = vector.extract_strided_slice %41 {offsets = [0, 96], sizes = [8, 32], strides = [1, 1]} : vector<8x128xbf16> to vector<8x32xbf16>
    %107 = vector.extract_strided_slice %42 {offsets = [0, 96], sizes = [16, 32], strides = [1, 1]} : vector<16x128xbf16> to vector<16x32xbf16>
    %cst_35 = arith.constant dense<0.000000e+00> : vector<8x16xf32>
    %108 = tpu.matmul %106, %107, %cst_35 {dimension_numbers = #tpu.dot_dimension_numbers<[1], [1], [0], [0], [0, 0, 1, 0], [], []>} : vector<8x32xbf16>, vector<16x32xbf16>, vector<8x16xf32> -> vector<8x16xf32>
    %cst_36 = arith.constant dense<0xFF800000> : vector<8xf32>
    %109 = vector.multi_reduction <maximumf>, %108, %cst_36 [1] : vector<8x16xf32> to vector<8xf32>
    %110 = vector.shape_cast %109 : vector<8xf32> to vector<8x1xf32>
    %111 = vector.broadcast %110 : vector<8x1xf32> to vector<8x16xf32>
    %112 = arith.subf %108, %111 : vector<8x16xf32>
    %113 = math.exp %112 : vector<8x16xf32>
    %cst_37 = arith.constant dense<0.000000e+00> : vector<8xf32>
    %114 = vector.multi_reduction <add>, %113, %cst_37 [1] : vector<8x16xf32> to vector<8xf32>
    %115 = vector.shape_cast %114 : vector<8xf32> to vector<8x1xf32>
    %116 = tpu.reciprocal %115 {approx = true} : vector<8x1xf32> -> vector<8x1xf32>
    %117 = vector.broadcast %116 : vector<8x1xf32> to vector<8x16xf32>
    %118 = arith.mulf %113, %117 : vector<8x16xf32>
    %119 = arith.truncf %118 : vector<8x16xf32> to vector<8x16xbf16>
    %120 = vector.extract_strided_slice %43 {offsets = [0, 96], sizes = [16, 32], strides = [1, 1]} : vector<16x128xbf16> to vector<16x32xbf16>
    %cst_38 = arith.constant dense<0.000000e+00> : vector<8x32xf32>
    %121 = tpu.matmul %119, %120, %cst_38 {dimension_numbers = #tpu.dot_dimension_numbers<[1], [0], [0], [1], [0, 0, 1, 1], [], []>} : vector<8x16xbf16>, vector<16x32xbf16>, vector<8x32xf32> -> vector<8x32xf32>
    %122 = arith.truncf %121 : vector<8x32xf32> to vector<8x32xbf16>
    %123 = vector.extract_strided_slice %44 {offsets = [96, 0], sizes = [32, 128], strides = [1, 1]} : vector<128x128xbf16> to vector<32x128xbf16>
    %cst_39 = arith.constant dense<0.000000e+00> : vector<8x128xf32>
    %124 = tpu.matmul %122, %123, %cst_39 {dimension_numbers = #tpu.dot_dimension_numbers<[1], [0], [0], [1], [0, 0, 1, 1], [], []>} : vector<8x32xbf16>, vector<32x128xbf16>, vector<8x128xf32> -> vector<8x128xf32>
    %125 = arith.addf %105, %124 : vector<8x128xf32>
    %c0_40 = arith.constant 0 : index
    %c0_41 = arith.constant 0 : index
    %126 = vector.load %arg6[%c0_40, %c0_41] : memref<1x128xf32, #tpu.memory_space<vmem>>, vector<1x128xf32>
    %127 = vector.broadcast %126 : vector<1x128xf32> to vector<8x128xf32>
    %128 = arith.addf %125, %127 : vector<8x128xf32>
    %129 = arith.addf %8, %128 : vector<8x128xf32>
    %130 = vector.extract_strided_slice %0 {offsets = [2, 0], sizes = [1, 128], strides = [1, 1]} : vector<8x128xf32> to vector<1x128xf32>
    %131 = vector.extract_strided_slice %0 {offsets = [3, 0], sizes = [1, 128], strides = [1, 1]} : vector<8x128xf32> to vector<1x128xf32>
    %cst_42 = arith.constant dense<0.000000e+00> : vector<8xf32>
    %132 = vector.multi_reduction <add>, %129, %cst_42 [1] : vector<8x128xf32> to vector<8xf32>
    %133 = vector.shape_cast %132 : vector<8xf32> to vector<8x1xf32>
    %cst_43 = arith.constant 1.280000e+02 : f32
    %134 = vector.broadcast %cst_43 : f32 to vector<8x1xf32>
    %135 = arith.divf %133, %134 : vector<8x1xf32>
    %136 = vector.broadcast %135 : vector<8x1xf32> to vector<8x128xf32>
    %137 = arith.subf %129, %136 : vector<8x128xf32>
    %138 = arith.mulf %137, %137 : vector<8x128xf32>
    %cst_44 = arith.constant dense<0.000000e+00> : vector<8xf32>
    %139 = vector.multi_reduction <add>, %138, %cst_44 [1] : vector<8x128xf32> to vector<8xf32>
    %140 = vector.shape_cast %139 : vector<8xf32> to vector<8x1xf32>
    %cst_45 = arith.constant 1.280000e+02 : f32
    %141 = vector.broadcast %cst_45 : f32 to vector<8x1xf32>
    %142 = arith.divf %140, %141 : vector<8x1xf32>
    %143 = vector.broadcast %135 : vector<8x1xf32> to vector<8x128xf32>
    %144 = arith.subf %129, %143 : vector<8x128xf32>
    %cst_46 = arith.constant 9.99999974E-6 : f32
    %145 = vector.broadcast %cst_46 : f32 to vector<8x1xf32>
    %146 = arith.addf %142, %145 : vector<8x1xf32>
    %147 = math.rsqrt %146 : vector<8x1xf32>
    %148 = vector.broadcast %147 : vector<8x1xf32> to vector<8x128xf32>
    %149 = arith.mulf %144, %148 : vector<8x128xf32>
    %150 = vector.broadcast %130 : vector<1x128xf32> to vector<8x128xf32>
    %151 = arith.mulf %149, %150 : vector<8x128xf32>
    %152 = vector.broadcast %131 : vector<1x128xf32> to vector<8x128xf32>
    %153 = arith.addf %151, %152 : vector<8x128xf32>
    %154 = vector.extract_strided_slice %0 {offsets = [4, 0], sizes = [1, 128], strides = [1, 1]} : vector<8x128xf32> to vector<1x128xf32>
    %155 = vector.extract_strided_slice %0 {offsets = [5, 0], sizes = [1, 128], strides = [1, 1]} : vector<8x128xf32> to vector<1x128xf32>
    %cst_47 = arith.constant dense<0.000000e+00> : vector<8xf32>
    %156 = vector.multi_reduction <add>, %153, %cst_47 [1] : vector<8x128xf32> to vector<8xf32>
    %157 = vector.shape_cast %156 : vector<8xf32> to vector<8x1xf32>
    %cst_48 = arith.constant 1.280000e+02 : f32
    %158 = vector.broadcast %cst_48 : f32 to vector<8x1xf32>
    %159 = arith.divf %157, %158 : vector<8x1xf32>
    %160 = vector.broadcast %159 : vector<8x1xf32> to vector<8x128xf32>
    %161 = arith.subf %153, %160 : vector<8x128xf32>
    %162 = arith.mulf %161, %161 : vector<8x128xf32>
    %cst_49 = arith.constant dense<0.000000e+00> : vector<8xf32>
    %163 = vector.multi_reduction <add>, %162, %cst_49 [1] : vector<8x128xf32> to vector<8xf32>
    %164 = vector.shape_cast %163 : vector<8xf32> to vector<8x1xf32>
    %cst_50 = arith.constant 1.280000e+02 : f32
    %165 = vector.broadcast %cst_50 : f32 to vector<8x1xf32>
    %166 = arith.divf %164, %165 : vector<8x1xf32>
    %167 = vector.broadcast %159 : vector<8x1xf32> to vector<8x128xf32>
    %168 = arith.subf %153, %167 : vector<8x128xf32>
    %cst_51 = arith.constant 9.99999974E-6 : f32
    %169 = vector.broadcast %cst_51 : f32 to vector<8x1xf32>
    %170 = arith.addf %166, %169 : vector<8x1xf32>
    %171 = math.rsqrt %170 : vector<8x1xf32>
    %172 = vector.broadcast %171 : vector<8x1xf32> to vector<8x128xf32>
    %173 = arith.mulf %168, %172 : vector<8x128xf32>
    %174 = vector.broadcast %154 : vector<1x128xf32> to vector<8x128xf32>
    %175 = arith.mulf %173, %174 : vector<8x128xf32>
    %176 = vector.broadcast %155 : vector<1x128xf32> to vector<8x128xf32>
    %177 = arith.addf %175, %176 : vector<8x128xf32>
    %178 = arith.truncf %177 : vector<8x128xf32> to vector<8x128xbf16>
    %cst_52 = arith.constant 0.000000e+00 : f32
    %179 = vector.broadcast %cst_52 : f32 to vector<8x128xf32>
    %c0_53 = arith.constant 0 : index
    %c0_54 = arith.constant 0 : index
    %180 = vector.load %arg8[%c0_53, %c0_54] : memref<128x512xbf16, #tpu.memory_space<vmem>>, vector<128x256xbf16>
    %cst_55 = arith.constant dense<0.000000e+00> : vector<8x256xf32>
    %181 = tpu.matmul %178, %180, %cst_55 {dimension_numbers = #tpu.dot_dimension_numbers<[1], [0], [0], [1], [0, 0, 1, 1], [], []>} : vector<8x128xbf16>, vector<128x256xbf16>, vector<8x256xf32> -> vector<8x256xf32>
    %c0_56 = arith.constant 0 : index
    %c0_57 = arith.constant 0 : index
    %182 = vector.load %arg9[%c0_56, %c0_57] : memref<1x512xf32, #tpu.memory_space<vmem>>, vector<1x256xf32>
    %183 = vector.broadcast %182 : vector<1x256xf32> to vector<8x256xf32>
    %184 = arith.addf %181, %183 : vector<8x256xf32>
    %185 = arith.negf %184 : vector<8x256xf32>
    %186 = math.exp %185 : vector<8x256xf32>
    %cst_58 = arith.constant 1.000000e+00 : f32
    %187 = vector.broadcast %cst_58 : f32 to vector<8x256xf32>
    %188 = arith.addf %187, %186 : vector<8x256xf32>
    %189 = arith.divf %187, %188 : vector<8x256xf32>
    %190 = arith.mulf %184, %189 : vector<8x256xf32>
    %191 = arith.truncf %190 : vector<8x256xf32> to vector<8x256xbf16>
    %c0_59 = arith.constant 0 : index
    %c0_60 = arith.constant 0 : index
    %192 = vector.load %arg10[%c0_59, %c0_60] : memref<512x128xbf16, #tpu.memory_space<vmem>>, vector<256x128xbf16>
    %cst_61 = arith.constant dense<0.000000e+00> : vector<8x128xf32>
    %193 = tpu.matmul %191, %192, %cst_61 {dimension_numbers = #tpu.dot_dimension_numbers<[1], [0], [0], [1], [0, 0, 1, 1], [], []>} : vector<8x256xbf16>, vector<256x128xbf16>, vector<8x128xf32> -> vector<8x128xf32>
    %194 = arith.addf %179, %193 : vector<8x128xf32>
    %c0_62 = arith.constant 0 : index
    %c256 = arith.constant 256 : index
    %195 = vector.load %arg8[%c0_62, %c256] : memref<128x512xbf16, #tpu.memory_space<vmem>>, vector<128x256xbf16>
    %cst_63 = arith.constant dense<0.000000e+00> : vector<8x256xf32>
    %196 = tpu.matmul %178, %195, %cst_63 {dimension_numbers = #tpu.dot_dimension_numbers<[1], [0], [0], [1], [0, 0, 1, 1], [], []>} : vector<8x128xbf16>, vector<128x256xbf16>, vector<8x256xf32> -> vector<8x256xf32>
    %c0_64 = arith.constant 0 : index
    %c256_65 = arith.constant 256 : index
    %197 = vector.load %arg9[%c0_64, %c256_65] : memref<1x512xf32, #tpu.memory_space<vmem>>, vector<1x256xf32>
    %198 = vector.broadcast %197 : vector<1x256xf32> to vector<8x256xf32>
    %199 = arith.addf %196, %198 : vector<8x256xf32>
    %200 = arith.negf %199 : vector<8x256xf32>
    %201 = math.exp %200 : vector<8x256xf32>
    %cst_66 = arith.constant 1.000000e+00 : f32
    %202 = vector.broadcast %cst_66 : f32 to vector<8x256xf32>
    %203 = arith.addf %202, %201 : vector<8x256xf32>
    %204 = arith.divf %202, %203 : vector<8x256xf32>
    %205 = arith.mulf %199, %204 : vector<8x256xf32>
    %206 = arith.truncf %205 : vector<8x256xf32> to vector<8x256xbf16>
    %c256_67 = arith.constant 256 : index
    %c0_68 = arith.constant 0 : index
    %207 = vector.load %arg10[%c256_67, %c0_68] : memref<512x128xbf16, #tpu.memory_space<vmem>>, vector<256x128xbf16>
    %cst_69 = arith.constant dense<0.000000e+00> : vector<8x128xf32>
    %208 = tpu.matmul %206, %207, %cst_69 {dimension_numbers = #tpu.dot_dimension_numbers<[1], [0], [0], [1], [0, 0, 1, 1], [], []>} : vector<8x256xbf16>, vector<256x128xbf16>, vector<8x128xf32> -> vector<8x128xf32>
    %209 = arith.addf %194, %208 : vector<8x128xf32>
    %c0_70 = arith.constant 0 : index
    %c0_71 = arith.constant 0 : index
    %210 = vector.load %arg11[%c0_70, %c0_71] : memref<1x128xf32, #tpu.memory_space<vmem>>, vector<1x128xf32>
    %211 = vector.broadcast %210 : vector<1x128xf32> to vector<8x128xf32>
    %212 = arith.addf %209, %211 : vector<8x128xf32>
    %cst_72 = arith.constant 5.000000e-01 : f32
    %213 = vector.broadcast %cst_72 : f32 to vector<8x128xf32>
    %214 = arith.mulf %213, %212 : vector<8x128xf32>
    %215 = arith.addf %153, %214 : vector<8x128xf32>
    %216 = vector.extract_strided_slice %0 {offsets = [6, 0], sizes = [1, 128], strides = [1, 1]} : vector<8x128xf32> to vector<1x128xf32>
    %217 = vector.extract_strided_slice %0 {offsets = [7, 0], sizes = [1, 128], strides = [1, 1]} : vector<8x128xf32> to vector<1x128xf32>
    %cst_73 = arith.constant dense<0.000000e+00> : vector<8xf32>
    %218 = vector.multi_reduction <add>, %215, %cst_73 [1] : vector<8x128xf32> to vector<8xf32>
    %219 = vector.shape_cast %218 : vector<8xf32> to vector<8x1xf32>
    %cst_74 = arith.constant 1.280000e+02 : f32
    %220 = vector.broadcast %cst_74 : f32 to vector<8x1xf32>
    %221 = arith.divf %219, %220 : vector<8x1xf32>
    %222 = vector.broadcast %221 : vector<8x1xf32> to vector<8x128xf32>
    %223 = arith.subf %215, %222 : vector<8x128xf32>
    %224 = arith.mulf %223, %223 : vector<8x128xf32>
    %cst_75 = arith.constant dense<0.000000e+00> : vector<8xf32>
    %225 = vector.multi_reduction <add>, %224, %cst_75 [1] : vector<8x128xf32> to vector<8xf32>
    %226 = vector.shape_cast %225 : vector<8xf32> to vector<8x1xf32>
    %cst_76 = arith.constant 1.280000e+02 : f32
    %227 = vector.broadcast %cst_76 : f32 to vector<8x1xf32>
    %228 = arith.divf %226, %227 : vector<8x1xf32>
    %229 = vector.broadcast %221 : vector<8x1xf32> to vector<8x128xf32>
    %230 = arith.subf %215, %229 : vector<8x128xf32>
    %cst_77 = arith.constant 9.99999974E-6 : f32
    %231 = vector.broadcast %cst_77 : f32 to vector<8x1xf32>
    %232 = arith.addf %228, %231 : vector<8x1xf32>
    %233 = math.rsqrt %232 : vector<8x1xf32>
    %234 = vector.broadcast %233 : vector<8x1xf32> to vector<8x128xf32>
    %235 = arith.mulf %230, %234 : vector<8x128xf32>
    %236 = vector.broadcast %216 : vector<1x128xf32> to vector<8x128xf32>
    %237 = arith.mulf %235, %236 : vector<8x128xf32>
    %238 = vector.broadcast %217 : vector<1x128xf32> to vector<8x128xf32>
    %239 = arith.addf %237, %238 : vector<8x128xf32>
    %c0_78 = arith.constant 0 : index
    %c0_79 = arith.constant 0 : index
    %c0_80 = arith.constant 0 : index
    %240 = vector.load %arg12[%c0_78, %c0_79, %c0_80] : memref<1x8x128xf32, #tpu.memory_space<vmem>>, vector<1x8x128xf32>
    %241 = vector.shape_cast %240 : vector<1x8x128xf32> to vector<8x128xf32>
    %242 = vector.shape_cast %239 : vector<8x128xf32> to vector<1x8x128xf32>
    tpu.vector_store %arg12[%c0_78, %c0_79, %c0_80], %242 {strides = array<i32>} : memref<1x8x128xf32, #tpu.memory_space<vmem>>, vector<1x8x128xf32>,
    return
  }
  func.func @transform_0(%arg0: i32, %arg1: i32) -> (i32, i32, i32) {
    %c0_i32 = arith.constant 0 : i32
    %c0_i32_0 = arith.constant 0 : i32
    %c0_i32_1 = arith.constant 0 : i32
    return %arg0, %c0_i32, %c0_i32_0 : i32, i32, i32
  }
  func.func @transform_1(%arg0: i32, %arg1: i32) -> (i32, i32) {
    %c0_i32 = arith.constant 0 : i32
    %c0_i32_0 = arith.constant 0 : i32
    %c0_i32_1 = arith.constant 0 : i32
    return %c0_i32, %c0_i32_0 : i32, i32
  }
  func.func @transform_2(%arg0: i32, %arg1: i32) -> (i32, i32) {
    %c0_i32 = arith.constant 0 : i32
    %c0_i32_0 = arith.constant 0 : i32
    %c0_i32_1 = arith.constant 0 : i32
    return %c0_i32, %c0_i32_0 : i32, i32
  }
  func.func @transform_3(%arg0: i32, %arg1: i32) -> (i32, i32) {
    %c0_i32 = arith.constant 0 : i32
    %c0_i32_0 = arith.constant 0 : i32
    %c0_i32_1 = arith.constant 0 : i32
    return %c0_i32, %c0_i32_0 : i32, i32
  }
  func.func @transform_4(%arg0: i32, %arg1: i32) -> (i32, i32) {
    %c0_i32 = arith.constant 0 : i32
    %c0_i32_0 = arith.constant 0 : i32
    %c0_i32_1 = arith.constant 0 : i32
    return %c0_i32, %c0_i32_0 : i32, i32
  }
  func.func @transform_5(%arg0: i32, %arg1: i32) -> (i32, i32) {
    %c0_i32 = arith.constant 0 : i32
    %c0_i32_0 = arith.constant 0 : i32
    %c0_i32_1 = arith.constant 0 : i32
    return %c0_i32, %c0_i32_0 : i32, i32
  }
  func.func @transform_6(%arg0: i32, %arg1: i32) -> (i32, i32) {
    %c0_i32 = arith.constant 0 : i32
    %c0_i32_0 = arith.constant 0 : i32
    %c0_i32_1 = arith.constant 0 : i32
    return %c0_i32, %c0_i32_0 : i32, i32
  }
  func.func @transform_7(%arg0: i32, %arg1: i32) -> (i32, i32) {
    %c0_i32 = arith.constant 0 : i32
    %c0_i32_0 = arith.constant 0 : i32
    %c0_i32_1 = arith.constant 0 : i32
    return %c0_i32, %c0_i32_0 : i32, i32
  }
  func.func @transform_8(%arg0: i32, %arg1: i32) -> (i32, i32) {
    %c0_i32 = arith.constant 0 : i32
    %c0_i32_0 = arith.constant 0 : i32
    %c0_i32_1 = arith.constant 0 : i32
    return %c0_i32, %c0_i32_0 : i32, i32
  }
  func.func @transform_9(%arg0: i32, %arg1: i32) -> (i32, i32) {
    %c0_i32 = arith.constant 0 : i32
    %c0_i32_0 = arith.constant 0 : i32
    %c0_i32_1 = arith.constant 0 : i32
    return %c0_i32, %c0_i32_0 : i32, i32
  }
  func.func @transform_10(%arg0: i32, %arg1: i32) -> (i32, i32, i32) {
    %c0_i32 = arith.constant 0 : i32
    %c0_i32_0 = arith.constant 0 : i32
    return %arg0, %arg1, %c0_i32 : i32, i32, i32
  }
}

</mosaic_0001>

<llo_original>
// kernel: tpu_custom_call.1
$region0: #{tpu_custom_call.1}
  #allocation0 [shape = 'u32[]', space=smem, size = 0x4, offset = 0x4, fixed_abs, tag = 'smem constant byte address 0x4 - core index']
  #allocation1 [shape = 'u32[72,128]{1,0:T(1,128)}', space=vmem, size = 0x9000, scoped, tag = 'internal scratch']
  #allocation2 [shape = 'bf16[16,256]{1,0:T(8,128)(2,1)}', space=vmem, size = 0x2000, scoped, tag = 'scratch operand']
  %s0 = inlined_call_operand.hbm [shape: f32[2,16,128], index: 0, kind: input, shape index: {}]
  %s1 = inlined_call_operand.hbm [shape: bf16[128,384], index: 1, kind: input, shape index: {}]
  %s2 = inlined_call_operand.hbm [shape: f32[1,384], index: 2, kind: input, shape index: {}]
  %s3 = inlined_call_operand.hbm [shape: bf16[128,128], index: 3, kind: input, shape index: {}]
  %s4 = inlined_call_operand.vmem [shape: f32[1,128], index: 4, kind: input, shape index: {}]
  %s5 = inlined_call_operand.hbm [shape: f32[8,128], index: 5, kind: input, shape index: {}]
  %s6 = inlined_call_operand.hbm [shape: bf16[128,512], index: 6, kind: input, shape index: {}]
  %s7 = inlined_call_operand.vmem [shape: f32[1,512], index: 7, kind: input, shape index: {}]
  %s8 = inlined_call_operand.hbm [shape: bf16[512,128], index: 8, kind: input, shape index: {}]
  %s9 = inlined_call_operand.vmem [shape: f32[1,128], index: 9, kind: input, shape index: {}]
  %s10 = inlined_call_operand.hbm [shape: f32[2,16,128], index: 10, kind: output, shape index: {}]
  %s11 = sld [smem:[#allocation0]]
  $region105: #{tpu_custom_call.1} parent=0
    _
  %s13 = ssub.s32 1, %s11
  %s14 = scalar_select 0, %s13, %s11
  $region1: #{tpu_custom_call.1} parent=0
    #allocation3 [shape = 'u8[16384]{0}', space=vmem, size = 0x4000, scoped, tag = 'input window, operand 0']
    #allocation4 [shape = 's32[2]{0}', space=sflag, size = 0x8, scoped, tag = 'scoped memory for tpu_custom_call.1']
    #allocation5 [shape = 's32[2]{0}', space=sflag, size = 0x8, scoped, tag = 'scoped memory for tpu_custom_call.1']
    #allocation6 [shape = 'u8[98304]{0}', space=vmem, size = 0x18000, scoped, tag = 'input window, operand 1, single buffered']
    #allocation7 [shape = 's32[1]{0}', space=sflag, size = 0x4, scoped, tag = 'scoped memory for tpu_custom_call.1']
    #allocation8 [shape = 'u8[1536]{0}', space=vmem, size = 0x800, scoped, tag = 'input window, operand 2, single buffered']
    #allocation9 [shape = 'u8[32768]{0}', space=vmem, size = 0x8000, scoped, tag = 'input window, operand 3, single buffered']
    #allocation10 [shape = 's32[1]{0}', space=sflag, size = 0x4, scoped, tag = 'scoped memory for tpu_custom_call.1']
    #allocation11 [shape = 'u8[4096]{0}', space=vmem, size = 0x1000, scoped, tag = 'input window, operand 5, single buffered']
    #allocation12 [shape = 'u8[131072]{0}', space=vmem, size = 0x20000, scoped, tag = 'input window, operand 6, single buffered']
    #allocation13 [shape = 's32[1]{0}', space=sflag, size = 0x4, scoped, tag = 'scoped memory for tpu_custom_call.1']
    #allocation14 [shape = 'u8[131072]{0}', space=vmem, size = 0x20000, scoped, tag = 'input window, operand 8, single buffered']
    #allocation15 [shape = 'u8[8192]{0}', space=vmem, size = 0x2000, scoped, tag = 'output window, operand 0']
    %15 = vsyncpa [#allocation4], 0
    %s16 = scalar_lea.sflag [#allocation4], 1
    %17 = vsyncpa %s16, 0
    %18 = vsyncpa [#allocation7], 0
    %19 = vsyncpa [#allocation10], 0
    %20 = vsyncpa [#allocation13], 0
    %21 = vsyncpa [#allocation5], 0
    %s22 = scalar_lea.sflag [#allocation5], 1
    %23 = vsyncpa %s22, 0
    loop: start=0, step=1, limit=6
    $region2: #{tpu_custom_call.1} parent=1 // loop_pre_header
      _
    $region3: #{tpu_custom_call.1} parent=1 // loop_header
      %s25 = sphi 0, %s29
      %p26 = scmp.ge.s32.totalorder %s25, 6
      %s32 = sphi 0, %s44
      %s33 = sphi 0, %s40
      %s34 = sphi 0, %s32
      %s35 = sphi 0, %s33
      %s36 = sphi 0, %s34
      %s37 = sphi 0, %s35
      %s47 = sphi 0, %s49
      %s50 = sphi 0, %s47
      %s51 = sphi 0, %s50
      %s67 = sphi 0, %s51
      %s71 = sphi 0, %s71
      %s73 = sphi 0, %s71
      %s74 = sphi 0, %s73
      %s88 = sphi 0, %s74
      %s92 = sphi 0, %s92
      %s94 = sphi 0, %s92
      %s95 = sphi 0, %s94
      %s109 = sphi 0, %s95
      %s113 = sphi 0, %s113
      %s115 = sphi 0, %s113
      %s116 = sphi 0, %s115
      %s130 = sphi 0, %s116
      %s134 = sphi 0, %s134
      %s136 = sphi 0, %s134
      %s137 = sphi 0, %s136
      %s151 = sphi 0, %s137
      %s155 = sphi 0, %s155
      %s157 = sphi 0, %s155
      %s158 = sphi 0, %s157
      %s172 = sphi 0, %s158
      %s176 = sphi 0, %s176
      %s178 = sphi 0, %s176
      %s179 = sphi 0, %s178
      %s193 = sphi 0, %s179
      %s197 = sphi 0, %s197
      %s199 = sphi 0, %s197
      %s200 = sphi 0, %s199
      %s214 = sphi 0, %s200
      %s218 = sphi 0, %s218
      %s220 = sphi 0, %s218
      %s221 = sphi 0, %s220
      %s235 = sphi 0, %s221
      %s239 = sphi 0, %s239
      %s241 = sphi 0, %s239
      %s242 = sphi 0, %s241
      %s256 = sphi 0, %s242
      %s264 = sphi 0, %s266
      %s267 = sphi 0, %s264
      %s268 = sphi 0, %s267
      %s284 = sphi 0, %s268
    $region4: #{tpu_custom_call.1} parent=1 // loop_header_branch
      %28 = sbr.rel (%p26) target = $region8
    $region5: #{tpu_custom_call.1} parent=1 // loop_body
      %s30 = ssub.s32 %s25, 1
      %s31 = ssub.s32 %s25, 2
      %s38 = sadd.s32 1, %s33
      %p39 = scmp.ge.s32.totalorder %s38, 2
      %s40 = scalar_select %p39, 0, %s38
      %s41 = sadd.s32 1, %s32
      %s42 = scalar_select %p39, %s41, %s32
      %p43 = scmp.ge.s32.totalorder %s42, 2
      %s44 = scalar_select %p43, 0, %s42
      %s45 = ssub.s32 %s32, %s44
      %p46 = scmp.eq.s32.totalorder %s45, 0
      %s48 = sadd.s32 %s47, 1
      %s49 = scalar_select %p46, %s47, %s48
      %p52 = pneg %p46
      %p53 = scmp.eq.s32.totalorder %s25, 3
      %p54 = por %p52, %p53
      %p55 = scmp.ne.s32.totalorder %s47, %s50
      %p56 = scmp.eq.s32.totalorder %s25, 0
      %p57 = por %p55, %p56
      %p58 = scmp.ne.s32.totalorder %s47, %s50
      %p59 = scmp.eq.s32.totalorder %s30, 3
      %p60 = por %p58, %p59
      %p61 = scmp.ne.s32.totalorder %s50, %s51
      %p62 = scmp.eq.s32.totalorder %s30, 0
      %p63 = por %p61, %p62
      %p64 = scmp.ne.s32.totalorder %s50, %s51
      %p65 = scmp.eq.s32.totalorder %s31, 3
      %p66 = por %p64, %p65
      %p68 = scmp.ne.s32.totalorder %s51, %s67
      %p69 = scmp.eq.s32.totalorder %s31, 0
      %p70 = por %p68, %p69
      %s72 = sadd.s32 %s71, 1
      %p75 = scmp.eq.s32.totalorder %s25, 3
      %p76 = scmp.ne.s32.totalorder %s71, %s73
      %p77 = scmp.eq.s32.totalorder %s25, 0
      %p78 = por %p76, %p77
      %p79 = scmp.ne.s32.totalorder %s71, %s73
      %p80 = scmp.eq.s32.totalorder %s30, 3
      %p81 = por %p79, %p80
      %p82 = scmp.ne.s32.totalorder %s73, %s74
      %p83 = scmp.eq.s32.totalorder %s30, 0
      %p84 = por %p82, %p83
      %p85 = scmp.ne.s32.totalorder %s73, %s74
      %p86 = scmp.eq.s32.totalorder %s31, 3
      %p87 = por %p85, %p86
      %p89 = scmp.ne.s32.totalorder %s74, %s88
      %p90 = scmp.eq.s32.totalorder %s31, 0
      %p91 = por %p89, %p90
      %s93 = sadd.s32 %s92, 1
      %p96 = scmp.eq.s32.totalorder %s25, 3
      %p97 = scmp.ne.s32.totalorder %s92, %s94
      %p98 = scmp.eq.s32.totalorder %s25, 0
      %p99 = por %p97, %p98
      %p100 = scmp.ne.s32.totalorder %s92, %s94
      %p101 = scmp.eq.s32.totalorder %s30, 3
      %p102 = por %p100, %p101
      %p103 = scmp.ne.s32.totalorder %s94, %s95
      %p104 = scmp.eq.s32.totalorder %s30, 0
      %p105 = por %p103, %p104
      %p106 = scmp.ne.s32.totalorder %s94, %s95
      %p107 = scmp.eq.s32.totalorder %s31, 3
      %p108 = por %p106, %p107
      %p110 = scmp.ne.s32.totalorder %s95, %s109
      %p111 = scmp.eq.s32.totalorder %s31, 0
      %p112 = por %p110, %p111
      %s114 = sadd.s32 %s113, 1
      %p117 = scmp.eq.s32.totalorder %s25, 3
      %p118 = scmp.ne.s32.totalorder %s113, %s115
      %p119 = scmp.eq.s32.totalorder %s25, 0
      %p120 = por %p118, %p119
      %p121 = scmp.ne.s32.totalorder %s113, %s115
      %p122 = scmp.eq.s32.totalorder %s30, 3
      %p123 = por %p121, %p122
      %p124 = scmp.ne.s32.totalorder %s115, %s116
      %p125 = scmp.eq.s32.totalorder %s30, 0
      %p126 = por %p124, %p125
      %p127 = scmp.ne.s32.totalorder %s115, %s116
      %p128 = scmp.eq.s32.totalorder %s31, 3
      %p129 = por %p127, %p128
      %p131 = scmp.ne.s32.totalorder %s116, %s130
      %p132 = scmp.eq.s32.totalorder %s31, 0
      %p133 = por %p131, %p132
      %s135 = sadd.s32 %s134, 1
      %p138 = scmp.eq.s32.totalorder %s25, 3
      %p139 = scmp.ne.s32.totalorder %s134, %s136
      %p140 = scmp.eq.s32.totalorder %s25, 0
      %p141 = por %p139, %p140
      %p142 = scmp.ne.s32.totalorder %s134, %s136
      %p143 = scmp.eq.s32.totalorder %s30, 3
      %p144 = por %p142, %p143
      %p145 = scmp.ne.s32.totalorder %s136, %s137
      %p146 = scmp.eq.s32.totalorder %s30, 0
      %p147 = por %p145, %p146
      %p148 = scmp.ne.s32.totalorder %s136, %s137
      %p149 = scmp.eq.s32.totalorder %s31, 3
      %p150 = por %p148, %p149
      %p152 = scmp.ne.s32.totalorder %s137, %s151
      %p153 = scmp.eq.s32.totalorder %s31, 0
      %p154 = por %p152, %p153
      %s156 = sadd.s32 %s155, 1
      %p159 = scmp.eq.s32.totalorder %s25, 3
      %p160 = scmp.ne.s32.totalorder %s155, %s157
      %p161 = scmp.eq.s32.totalorder %s25, 0
      %p162 = por %p160, %p161
      %p163 = scmp.ne.s32.totalorder %s155, %s157
      %p164 = scmp.eq.s32.totalorder %s30, 3
      %p165 = por %p163, %p164
      %p166 = scmp.ne.s32.totalorder %s157, %s158
      %p167 = scmp.eq.s32.totalorder %s30, 0
      %p168 = por %p166, %p167
      %p169 = scmp.ne.s32.totalorder %s157, %s158
      %p170 = scmp.eq.s32.totalorder %s31, 3
      %p171 = por %p169, %p170
      %p173 = scmp.ne.s32.totalorder %s158, %s172
      %p174 = scmp.eq.s32.totalorder %s31, 0
      %p175 = por %p173, %p174
      %s177 = sadd.s32 %s176, 1
      %p180 = scmp.eq.s32.totalorder %s25, 3
      %p181 = scmp.ne.s32.totalorder %s176, %s178
      %p182 = scmp.eq.s32.totalorder %s25, 0
      %p183 = por %p181, %p182
      %p184 = scmp.ne.s32.totalorder %s176, %s178
      %p185 = scmp.eq.s32.totalorder %s30, 3
      %p186 = por %p184, %p185
      %p187 = scmp.ne.s32.totalorder %s178, %s179
      %p188 = scmp.eq.s32.totalorder %s30, 0
      %p189 = por %p187, %p188
      %p190 = scmp.ne.s32.totalorder %s178, %s179
      %p191 = scmp.eq.s32.totalorder %s31, 3
      %p192 = por %p190, %p191
      %p194 = scmp.ne.s32.totalorder %s179, %s193
      %p195 = scmp.eq.s32.totalorder %s31, 0
      %p196 = por %p194, %p195
      %s198 = sadd.s32 %s197, 1
      %p201 = scmp.eq.s32.totalorder %s25, 3
      %p202 = scmp.ne.s32.totalorder %s197, %s199
      %p203 = scmp.eq.s32.totalorder %s25, 0
      %p204 = por %p202, %p203
      %p205 = scmp.ne.s32.totalorder %s197, %s199
      %p206 = scmp.eq.s32.totalorder %s30, 3
      %p207 = por %p205, %p206
      %p208 = scmp.ne.s32.totalorder %s199, %s200
      %p209 = scmp.eq.s32.totalorder %s30, 0
      %p210 = por %p208, %p209
      %p211 = scmp.ne.s32.totalorder %s199, %s200
      %p212 = scmp.eq.s32.totalorder %s31, 3
      %p213 = por %p211, %p212
      %p215 = scmp.ne.s32.totalorder %s200, %s214
      %p216 = scmp.eq.s32.totalorder %s31, 0
      %p217 = por %p215, %p216
      %s219 = sadd.s32 %s218, 1
      %p222 = scmp.eq.s32.totalorder %s25, 3
      %p223 = scmp.ne.s32.totalorder %s218, %s220
      %p224 = scmp.eq.s32.totalorder %s25, 0
      %p225 = por %p223, %p224
      %p226 = scmp.ne.s32.totalorder %s218, %s220
      %p227 = scmp.eq.s32.totalorder %s30, 3
      %p228 = por %p226, %p227
      %p229 = scmp.ne.s32.totalorder %s220, %s221
      %p230 = scmp.eq.s32.totalorder %s30, 0
      %p231 = por %p229, %p230
      %p232 = scmp.ne.s32.totalorder %s220, %s221
      %p233 = scmp.eq.s32.totalorder %s31, 3
      %p234 = por %p232, %p233
      %p236 = scmp.ne.s32.totalorder %s221, %s235
      %p237 = scmp.eq.s32.totalorder %s31, 0
      %p238 = por %p236, %p237
      %s240 = sadd.s32 %s239, 1
      %p243 = scmp.eq.s32.totalorder %s25, 3
      %p244 = scmp.ne.s32.totalorder %s239, %s241
      %p245 = scmp.eq.s32.totalorder %s25, 0
      %p246 = por %p244, %p245
      %p247 = scmp.ne.s32.totalorder %s239, %s241
      %p248 = scmp.eq.s32.totalorder %s30, 3
      %p249 = por %p247, %p248
      %p250 = scmp.ne.s32.totalorder %s241, %s242
      %p251 = scmp.eq.s32.totalorder %s30, 0
      %p252 = por %p250, %p251
      %p253 = scmp.ne.s32.totalorder %s241, %s242
      %p254 = scmp.eq.s32.totalorder %s31, 3
      %p255 = por %p253, %p254
      %p257 = scmp.ne.s32.totalorder %s242, %s256
      %p258 = scmp.eq.s32.totalorder %s31, 0
      %p259 = por %p257, %p258
      %s260 = ssub.s32 %s32, %s44
      %s261 = ssub.s32 %s33, %s40
      %s262 = sor.u32 %s260, %s261
      %p263 = scmp.eq.s32.totalorder %s262, 0
      %s265 = sadd.s32 %s264, 1
      %s266 = scalar_select %p263, %s264, %s265
      %p269 = pneg %p263
      %p270 = scmp.eq.s32.totalorder %s25, 3
      %p271 = por %p269, %p270
      %p272 = scmp.ne.s32.totalorder %s264, %s267
      %p273 = scmp.eq.s32.totalorder %s25, 0
      %p274 = por %p272, %p273
      %p275 = scmp.ne.s32.totalorder %s264, %s267
      %p276 = scmp.eq.s32.totalorder %s30, 3
      %p277 = por %p275, %p276
      %p278 = scmp.ne.s32.totalorder %s267, %s268
      %p279 = scmp.eq.s32.totalorder %s30, 0
      %p280 = por %p278, %p279
      %p281 = scmp.ne.s32.totalorder %s267, %s268
      %p282 = scmp.eq.s32.totalorder %s31, 3
      %p283 = por %p281, %p282
      %p285 = scmp.ne.s32.totalorder %s268, %s284
      %p286 = scmp.eq.s32.totalorder %s31, 0
      %p287 = por %p285, %p286
      %p288 = scmp.le.s32.totalorder 1, %s25
      %p289 = scmp.lt.s32.totalorder %s25, 5
      %p290 = pnand %p288, %p289
      %p291 = pneg %p290
      // Predicated region
      $region9: #{tpu_custom_call.1} parent=5 // pred_check
        _
      $region10: #{tpu_custom_call.1} parent=5 // pred_check_branch
        %293 = sbr.rel (%p290) target = $region12
      $region11: #{tpu_custom_call.1} parent=5 // pred_region
        %s294 = ssub.s32 %s25, 1
        // Predicated region
        $region13: #{tpu_custom_call.1} parent=11 // pred_check
          %p295 = pneg %p84
        $region14: #{tpu_custom_call.1} parent=11 // pred_check_branch
          %297 = sbr.rel (%p295) target = $region16
        $region15: #{tpu_custom_call.1} parent=11 // pred_region
          %299 = vsyncadd [#allocation7], 0
          %s300 = sshll.u32 %s1, 4
          %s301 = int_to_ptr.hbm [resolvable:$true] %s300
          %s302 = sshll.u32 [#allocation6], 4
          %s303 = int_to_ptr.vmem [resolvable:$true] %s302
          %308 = dma.hbm_to_vmem [thread:$0]  %s301, 3072, %s303, [#allocation7], 192, 192, 12
        $region16: #{tpu_custom_call.1} parent=11 // pred_fallthru
          _
        // Predicated region
        $region17: #{tpu_custom_call.1} parent=11 // pred_check
          %p309 = pneg %p105
        $region18: #{tpu_custom_call.1} parent=11 // pred_check_branch
          %311 = sbr.rel (%p309) target = $region20
        $region19: #{tpu_custom_call.1} parent=11 // pred_region
          %313 = vsyncadd [#allocation7], 0
          %s315 = sshll.u32 %s2, 4
          %s316 = int_to_ptr.hbm [resolvable:$true] %s315
          %s317 = sshll.u32 [#allocation8], 4
          %s318 = int_to_ptr.vmem [resolvable:$true] %s317
          %320 = dma.hbm_to_vmem [thread:$0]  %s316, 48, %s318, [#allocation7]
        $region20: #{tpu_custom_call.1} parent=11 // pred_fallthru
          _
        // Predicated region
        $region21: #{tpu_custom_call.1} parent=11 // pred_check
          %p321 = pneg %p126
        $region22: #{tpu_custom_call.1} parent=11 // pred_check_branch
          %323 = sbr.rel (%p321) target = $region24
        $region23: #{tpu_custom_call.1} parent=11 // pred_region
          %325 = vsyncadd [#allocation10], 0
          %s326 = sshll.u32 %s3, 4
          %s327 = int_to_ptr.hbm [resolvable:$true] %s326
          %s328 = sshll.u32 [#allocation9], 4
          %s329 = int_to_ptr.vmem [resolvable:$true] %s328
          %334 = dma.hbm_to_vmem [thread:$0]  %s327, 1024, %s329, [#allocation10], 64, 64, 4
        $region24: #{tpu_custom_call.1} parent=11 // pred_fallthru
          _
        // Predicated region
        $region25: #{tpu_custom_call.1} parent=11 // pred_check
          %p335 = pneg %p147
        $region26: #{tpu_custom_call.1} parent=11 // pred_check_branch
          %337 = sbr.rel (%p335) target = $region28
        $region27: #{tpu_custom_call.1} parent=11 // pred_region
          _
        $region28: #{tpu_custom_call.1} parent=11 // pred_fallthru
          _
        // Predicated region
        $region29: #{tpu_custom_call.1} parent=11 // pred_check
          %p338 = pneg %p168
        $region30: #{tpu_custom_call.1} parent=11 // pred_check_branch
          %340 = sbr.rel (%p338) target = $region32
        $region31: #{tpu_custom_call.1} parent=11 // pred_region
          %342 = vsyncadd [#allocation10], 0
          %s344 = sshll.u32 %s5, 4
          %s345 = int_to_ptr.hbm [resolvable:$true] %s344
          %s346 = sshll.u32 [#allocation11], 4
          %s347 = int_to_ptr.vmem [resolvable:$true] %s346
          %349 = dma.hbm_to_vmem [thread:$0]  %s345, 128, %s347, [#allocation10]
        $region32: #{tpu_custom_call.1} parent=11 // pred_fallthru
          _
        // Predicated region
        $region33: #{tpu_custom_call.1} parent=11 // pred_check
          %p350 = pneg %p189
        $region34: #{tpu_custom_call.1} parent=11 // pred_check_branch
          %352 = sbr.rel (%p350) target = $region36
        $region35: #{tpu_custom_call.1} parent=11 // pred_region
          %354 = vsyncadd [#allocation13], 0
          %s355 = sshll.u32 %s6, 4
          %s356 = int_to_ptr.hbm [resolvable:$true] %s355
          %s357 = sshll.u32 [#allocation12], 4
          %s358 = int_to_ptr.vmem [resolvable:$true] %s357
          %363 = dma.hbm_to_vmem [thread:$0]  %s356, 4096, %s358, [#allocation13], 256, 256, 16
        $region36: #{tpu_custom_call.1} parent=11 // pred_fallthru
          _
        // Predicated region
        $region37: #{tpu_custom_call.1} parent=11 // pred_check
          %p364 = pneg %p210
        $region38: #{tpu_custom_call.1} parent=11 // pred_check_branch
          %366 = sbr.rel (%p364) target = $region40
        $region39: #{tpu_custom_call.1} parent=11 // pred_region
          _
        $region40: #{tpu_custom_call.1} parent=11 // pred_fallthru
          _
        // Predicated region
        $region41: #{tpu_custom_call.1} parent=11 // pred_check
          %p367 = pneg %p231
        $region42: #{tpu_custom_call.1} parent=11 // pred_check_branch
          %369 = sbr.rel (%p367) target = $region44
        $region43: #{tpu_custom_call.1} parent=11 // pred_region
          %371 = vsyncadd [#allocation13], 0
          %s372 = sshll.u32 %s8, 4
          %s373 = int_to_ptr.hbm [resolvable:$true] %s372
          %s374 = sshll.u32 [#allocation14], 4
          %s375 = int_to_ptr.vmem [resolvable:$true] %s374
          %380 = dma.hbm_to_vmem [thread:$0]  %s373, 4096, %s375, [#allocation13], 64, 64, 4
        $region44: #{tpu_custom_call.1} parent=11 // pred_fallthru
          _
        // Predicated region
        $region45: #{tpu_custom_call.1} parent=11 // pred_check
          %p381 = pneg %p252
        $region46: #{tpu_custom_call.1} parent=11 // pred_check_branch
          %383 = sbr.rel (%p381) target = $region48
        $region47: #{tpu_custom_call.1} parent=11 // pred_region
          _
        $region48: #{tpu_custom_call.1} parent=11 // pred_fallthru
          _
      $region12: #{tpu_custom_call.1} parent=5 // pred_fallthru
        _
      %p384 = scmp.lt.s32.totalorder %s25, 4
      // Predicated region
      $region49: #{tpu_custom_call.1} parent=5 // pred_check
        %p385 = pneg %p384
      $region50: #{tpu_custom_call.1} parent=5 // pred_check_branch
        %387 = sbr.rel (%p385) target = $region52
      $region51: #{tpu_custom_call.1} parent=5 // pred_region
        // Predicated region
        $region53: #{tpu_custom_call.1} parent=51 // pred_check
          %p388 = pneg %p57
        $region54: #{tpu_custom_call.1} parent=51 // pred_check_branch
          %390 = sbr.rel (%p388) target = $region56
        $region55: #{tpu_custom_call.1} parent=51 // pred_region
          %s391 = sand.u32 %s47, 1
          %s392 = scalar_lea.sflag [#allocation4], %s391
          %s393 = sand.u32 %s47, 1
          %s394 = smul.addr %s393, 16
          %s395 = scalar_lea.vmem [#allocation3], %s394
          %397 = vsyncadd %s392, 0
          %s398 = smul.addr %s32, 2
          %s399 = smul.addr %s398, 8
          %s400 = scalar_lea.hbm %s0, %s399
          %s401 = sshll.u32 %s400, 4
          %s402 = int_to_ptr.hbm [resolvable:$true] %s401
          %s403 = sshll.u32 %s395, 4
          %s404 = int_to_ptr.vmem [resolvable:$true] %s403
          %409 = dma.hbm_to_vmem [thread:$0]  %s402, 256, %s404, %s392, 128, 128, 8
        $region56: #{tpu_custom_call.1} parent=51 // pred_fallthru
          _
      $region52: #{tpu_custom_call.1} parent=5 // pred_fallthru
        _
      %p410 = scmp.le.s32.totalorder 1, %s25
      %p411 = scmp.lt.s32.totalorder %s25, 5
      %p412 = pnand %p410, %p411
      %p413 = pneg %p412
      // Predicated region
      $region57: #{tpu_custom_call.1} parent=5 // pred_check
        _
      $region58: #{tpu_custom_call.1} parent=5 // pred_check_branch
        %415 = sbr.rel (%p412) target = $region60
      $region59: #{tpu_custom_call.1} parent=5 // pred_region
        %s416 = ssub.s32 %s25, 1
        %s417 = sand.u32 %s50, 1
        %s418 = scalar_lea.sflag [#allocation4], %s417
        %s419 = sand.u32 %s50, 1
        %s420 = smul.addr %s419, 16
        %s421 = scalar_lea.vmem [#allocation3], %s420
        // Predicated region
        $region61: #{tpu_custom_call.1} parent=59 // pred_check
          %p422 = pneg %p63
        $region62: #{tpu_custom_call.1} parent=59 // pred_check_branch
          %424 = sbr.rel (%p422) target = $region64
        $region63: #{tpu_custom_call.1} parent=59 // pred_region
          %426 = dma.done %s418, 256
        $region64: #{tpu_custom_call.1} parent=59 // pred_fallthru
          _
        // Predicated region
        $region65: #{tpu_custom_call.1} parent=59 // pred_check
          %p427 = pneg %p84
        $region66: #{tpu_custom_call.1} parent=59 // pred_check_branch
          %429 = sbr.rel (%p427) target = $region68
        $region67: #{tpu_custom_call.1} parent=59 // pred_region
          %431 = dma.done [#allocation7], 3072
        $region68: #{tpu_custom_call.1} parent=59 // pred_fallthru
          _
        // Predicated region
        $region69: #{tpu_custom_call.1} parent=59 // pred_check
          %p432 = pneg %p105
        $region70: #{tpu_custom_call.1} parent=59 // pred_check_branch
          %434 = sbr.rel (%p432) target = $region72
        $region71: #{tpu_custom_call.1} parent=59 // pred_region
          %436 = dma.done [#allocation7], 48
        $region72: #{tpu_custom_call.1} parent=59 // pred_fallthru
          _
        // Predicated region
        $region73: #{tpu_custom_call.1} parent=59 // pred_check
          %p437 = pneg %p126
        $region74: #{tpu_custom_call.1} parent=59 // pred_check_branch
          %439 = sbr.rel (%p437) target = $region76
        $region75: #{tpu_custom_call.1} parent=59 // pred_region
          %441 = dma.done [#allocation10], 1024
        $region76: #{tpu_custom_call.1} parent=59 // pred_fallthru
          _
        // Predicated region
        $region77: #{tpu_custom_call.1} parent=59 // pred_check
          %p442 = pneg %p168
        $region78: #{tpu_custom_call.1} parent=59 // pred_check_branch
          %444 = sbr.rel (%p442) target = $region80
        $region79: #{tpu_custom_call.1} parent=59 // pred_region
          %446 = dma.done [#allocation10], 128
        $region80: #{tpu_custom_call.1} parent=59 // pred_fallthru
          _
        // Predicated region
        $region81: #{tpu_custom_call.1} parent=59 // pred_check
          %p447 = pneg %p189
        $region82: #{tpu_custom_call.1} parent=59 // pred_check_branch
          %449 = sbr.rel (%p447) target = $region84
        $region83: #{tpu_custom_call.1} parent=59 // pred_region
          %451 = dma.done [#allocation13], 4096
        $region84: #{tpu_custom_call.1} parent=59 // pred_fallthru
          _
        // Predicated region
        $region85: #{tpu_custom_call.1} parent=59 // pred_check
          %p452 = pneg %p231
        $region86: #{tpu_custom_call.1} parent=59 // pred_check_branch
          %454 = sbr.rel (%p452) target = $region88
        $region87: #{tpu_custom_call.1} parent=59 // pred_region
          %456 = dma.done [#allocation13], 4096
        $region88: #{tpu_custom_call.1} parent=59 // pred_fallthru
          _
        %s457 = sand.u32 %s50, 1
        %s458 = scalar_lea.sflag [#allocation4], %s457
        %s459 = sand.u32 %s50, 1
        %s460 = smul.addr %s459, 16
        %s461 = scalar_lea.vmem [#allocation3], %s460
        %p462 = pneg %p63
        %p463 = pneg %p60
        %p464 = pneg %p84
        %p465 = pneg %p81
        %p466 = pneg %p105
        %p467 = pneg %p102
        %p468 = pneg %p126
        %p469 = pneg %p123
        %p470 = pneg %p147
        %p471 = pneg %p144
        %p472 = pneg %p168
        %p473 = pneg %p165
        %p474 = pneg %p189
        %p475 = pneg %p186
        %p476 = pneg %p210
        %p477 = pneg %p207
        %p478 = pneg %p231
        %p479 = pneg %p228
        %p480 = pneg %p252
        %p481 = pneg %p249
        %p482 = pneg %p280
        %p483 = pneg %p277
        %s484 = sand.u32 %s267, 1
        %s485 = scalar_lea.sflag [#allocation5], %s484
        %s486 = sand.u32 %s267, 1
        %s487 = smul.addr %s486, 8
        %s488 = scalar_lea.vmem [#allocation15], %s487
        %v490 = vld [vmem:[#allocation11] sm:$0xff]
        %p491 = scmp.eq.s32.totalorder %s35, 0
        // Predicated region
        $region89: #{tpu_custom_call.1} parent=59 // pred_check
          %p492 = pneg %p491
        $region90: #{tpu_custom_call.1} parent=59 // pred_check_branch
          %494 = sbr.rel (%p492) target = $region92
        $region91: #{tpu_custom_call.1} parent=59 // pred_region
          %v495 = vld [vmem:[%s421] sm:$0xff]
          %v496 = vld [vmem:[%s421 + $0x8] sm:$0xff]
          %497 = vadd.xlane.f32.xlu0 %v495
          %v498 = vpop.xlane.xlu0 %497
          %499 = vadd.xlane.f32.xlu0 %v496
          %v500 = vpop.xlane.xlu0 %499
          %v501 = vrcp.pop 128.0
          %v502 = vmul.f32 128.0, %v501
          %v503 = vsub.f32 1.0, %v502
          %v504 = vmul.f32 %v501, %v503
          %v505 = vadd.f32 %v501, %v504
          %vm506 = vweird.f32 %v501
          %v507 = vsel %vm506, %v501, %v505
          %v508 = vmul.f32 %v498, %v507
          %v509 = vmul.f32 %v500, %v507
          %v510 = vsub.f32 %v495, %v508
          %v511 = vsub.f32 %v496, %v509
          %v512 = vmul.f32 %v510, %v510
          %v513 = vmul.f32 %v511, %v511
          %514 = vadd.xlane.f32.xlu0 %v512
          %v515 = vpop.xlane.xlu0 %514
          %516 = vadd.xlane.f32.xlu0 %v513
          %v517 = vpop.xlane.xlu0 %516
          %v518 = vmul.f32 %v515, %v507
          %v519 = vmul.f32 %v517, %v507
          %v520 = vadd.f32 %v518, 1e-05
          %v521 = vadd.f32 %v519, 1e-05
          %v522 = vrsqrt.pop %v520
          %v523 = vmul.f32 %v522, %v520
          %v524 = vmul.f32 %v523, %v522
          %v525 = vmul.f32 0.5, %v524
          %v526 = vsub.f32 1.5, %v525
          %v527 = vmul.f32 %v522, %v526
          %vm528 = vweird.f32 %v520
          %vm529 = vweird.f32 %v522
          %vm530 = vmor %vm528, %vm529
          %v531 = vsel %vm530, %v522, %v527
          %v532 = vrsqrt.pop %v521
          %v533 = vmul.f32 %v532, %v521
          %v534 = vmul.f32 %v533, %v532
          %v535 = vmul.f32 0.5, %v534
          %v536 = vsub.f32 1.5, %v535
          %v537 = vmul.f32 %v532, %v536
          %vm538 = vweird.f32 %v521
          %vm539 = vweird.f32 %v532
          %vm540 = vmor %vm538, %vm539
          %v541 = vsel %vm540, %v532, %v537
          %v542 = vmul.f32 %v510, %v531
          %v543 = vmul.f32 %v511, %v541
          %v544 = vperm.slane %v490, 0
          %v545 = vmul.f32 %v542, %v544
          %v546 = vmul.f32 %v543, %v544
          %v547 = vperm.slane %v490, 1
          %v548 = vadd.f32 %v545, %v547
          %v549 = vadd.f32 %v546, %v547
          %v550 = vpack.c.bf16 %v549, %v548
          %v551 = vld [vmem:[#allocation6 + $0x4] sm:$0xff]
          %v552 = vld [vmem:[#allocation6 + $0x10] sm:$0xff]
          %v553 = vld [vmem:[#allocation6 + $0x1c] sm:$0xff]
          %v554 = vld [vmem:[#allocation6 + $0x28] sm:$0xff]
          %v555 = vld [vmem:[#allocation6 + $0x34] sm:$0xff]
          %v556 = vld [vmem:[#allocation6 + $0x40] sm:$0xff]
          %v557 = vld [vmem:[#allocation6 + $0x4c] sm:$0xff]
          %v558 = vld [vmem:[#allocation6 + $0x58] sm:$0xff]
          %v559 = vld [vmem:[#allocation6 + $0x64] sm:$0xff]
          %v560 = vld [vmem:[#allocation6 + $0x70] sm:$0xff]
          %v561 = vld [vmem:[#allocation6 + $0x7c] sm:$0xff]
          %v562 = vld [vmem:[#allocation6 + $0x88] sm:$0xff]
          %v563 = vld [vmem:[#allocation6 + $0x94] sm:$0xff]
          %v564 = vld [vmem:[#allocation6 + $0xa0] sm:$0xff]
          %v565 = vld [vmem:[#allocation6 + $0xac] sm:$0xff]
          %v566 = vld [vmem:[#allocation6 + $0xb8] sm:$0xff]
          %v567 = vld [vmem:[#allocation8 + $0x1] sm:$0x3]
          %v569 = vperm.slane %v567, 0
          %v570 = vperm.slane %v567, 1
          %v589 = vunpack.c.l.b16 %v551
          %v590 = vunpack.c.h.b16 %v551
          %v591 = vunpack.c.l.b16 %v552
          %v592 = vunpack.c.h.b16 %v552
          %v593 = vunpack.c.l.b16 %v553
          %v594 = vunpack.c.h.b16 %v553
          %v595 = vunpack.c.l.b16 %v554
          %v596 = vunpack.c.h.b16 %v554
          %v597 = vunpack.c.l.b16 %v555
          %v598 = vunpack.c.h.b16 %v555
          %v599 = vunpack.c.l.b16 %v556
          %v600 = vunpack.c.h.b16 %v556
          %v601 = vunpack.c.l.b16 %v557
          %v602 = vunpack.c.h.b16 %v557
          %v603 = vunpack.c.l.b16 %v558
          %v604 = vunpack.c.h.b16 %v558
          %v605 = vunpack.c.l.b16 %v559
          %v606 = vunpack.c.h.b16 %v559
          %v607 = vunpack.c.l.b16 %v560
          %v608 = vunpack.c.h.b16 %v560
          %v609 = vunpack.c.l.b16 %v561
          %v610 = vunpack.c.h.b16 %v561
          %v611 = vunpack.c.l.b16 %v562
          %v612 = vunpack.c.h.b16 %v562
          %v613 = vunpack.c.l.b16 %v563
          %v614 = vunpack.c.h.b16 %v563
          %v615 = vunpack.c.l.b16 %v564
          %v616 = vunpack.c.h.b16 %v564
          %v617 = vunpack.c.l.b16 %v565
          %v618 = vunpack.c.h.b16 %v565
          %v619 = vunpack.c.l.b16 %v566
          %v620 = vunpack.c.h.b16 %v566
          %v621 = vpack.c.b16 %v591, %v589
          %v622 = vpack.c.b16 %v592, %v590
          %v623 = vpack.c.b16 %v595, %v593
          %v624 = vpack.c.b16 %v596, %v594
          %v625 = vpack.c.b16 %v599, %v597
          %v626 = vpack.c.b16 %v600, %v598
          %v627 = vpack.c.b16 %v603, %v601
          %v628 = vpack.c.b16 %v604, %v602
          %v629 = vpack.c.b16 %v607, %v605
          %v630 = vpack.c.b16 %v608, %v606
          %v631 = vpack.c.b16 %v611, %v609
          %v632 = vpack.c.b16 %v612, %v610
          %v633 = vpack.c.b16 %v615, %v613
          %v634 = vpack.c.b16 %v616, %v614
          %v635 = vpack.c.b16 %v619, %v617
          %v636 = vpack.c.b16 %v620, %v618
          %653 = vmatpush.bf16.msra.mxu0 %v635
          %654 = vmatpush.bf16.msra.mxu0 %v633
          %655 = vmatpush.bf16.msra.mxu0 %v631
          %656 = vmatpush.bf16.msra.mxu0 %v629
          %657 = vmatpush.bf16.msra.mxu0 %v627
          %658 = vmatpush.bf16.msra.mxu0 %v625
          %659 = vmatpush.bf16.msra.mxu0 %v623
          %660 = vmatpush.bf16.msra.mxu0 %v621
          %661 = vmatmul.bf16.gmra.mxu0 %v550
          %v662 = vpop.f32.mrf.mxu0
          %v663 = vadd.f32 %v569, %v662
          %v664 = vpop.f32.mrf.mxu0
          %v665 = vadd.f32 %v569, %v664
          %666 = vdwg.mxu0
          %667 = vmatpush.bf16.msra.mxu0 %v636
          %668 = vmatpush.bf16.msra.mxu0 %v634
          %669 = vmatpush.bf16.msra.mxu0 %v632
          %670 = vmatpush.bf16.msra.mxu0 %v630
          %671 = vmatpush.bf16.msra.mxu0 %v628
          %672 = vmatpush.bf16.msra.mxu0 %v626
          %673 = vmatpush.bf16.msra.mxu0 %v624
          %674 = vmatpush.bf16.msra.mxu0 %v622
          %675 = vmatmul.bf16.gmra.mxu0 %v550
          %v676 = vpop.f32.mrf.mxu0
          %v677 = vadd.f32 %v570, %v676
          %v678 = vpop.f32.mrf.mxu0
          %v679 = vadd.f32 %v570, %v678
          %680 = vdwg.mxu0
          %v681 = vpack.c.bf16 %v677, %v663
          %v682 = vpack.c.bf16 %v679, %v665
          %683 = vst [vmem:[#allocation2] sm:$0xff] %v681
          %684 = vst [vmem:[#allocation2 + $0x8] sm:$0xff] %v682
        $region92: #{tpu_custom_call.1} parent=59 // pred_fallthru
          _
        %s685 = smul.u32 %s35, 8
        %s686 = scalar_lea.vmem %s421, %s685 [#allocation3]
        %v687 = vld [vmem:[%s686] sm:$0xff]
        %688 = vadd.xlane.f32.xlu0 %v687
        %v689 = vpop.xlane.xlu0 %688
        %v690 = vrcp.pop 128.0
        %v691 = vmul.f32 128.0, %v690
        %v692 = vsub.f32 1.0, %v691
        %v693 = vmul.f32 %v690, %v692
        %v694 = vadd.f32 %v690, %v693
        %vm695 = vweird.f32 %v690
        %v696 = vsel %vm695, %v690, %v694
        %v697 = vmul.f32 %v689, %v696
        %v698 = vsub.f32 %v687, %v697
        %v699 = vmul.f32 %v698, %v698
        %700 = vadd.xlane.f32.xlu0 %v699
        %v701 = vpop.xlane.xlu0 %700
        %v702 = vmul.f32 %v701, %v696
        %v703 = vadd.f32 %v702, 1e-05
        %v704 = vrsqrt.pop %v703
        %v705 = vmul.f32 %v704, %v703
        %v706 = vmul.f32 %v705, %v704
        %v707 = vmul.f32 0.5, %v706
        %v708 = vsub.f32 1.5, %v707
        %v709 = vmul.f32 %v704, %v708
        %vm710 = vweird.f32 %v703
        %vm711 = vweird.f32 %v704
        %vm712 = vmor %vm710, %vm711
        %v713 = vsel %vm712, %v704, %v709
        %v714 = vmul.f32 %v698, %v713
        %v715 = vperm.slane %v490, 0
        %v716 = vmul.f32 %v714, %v715
        %v717 = vperm.slane %v490, 1
        %v718 = vadd.f32 %v716, %v717
        %v719 = vpack.c.bf16 %v718, %v718
        %v720 = vld [vmem:[#allocation6] sm:$0xf]
        %v721 = vld [vmem:[#allocation6 + $0xc] sm:$0xf]
        %v722 = vld [vmem:[#allocation6 + $0x18] sm:$0xf]
        %v723 = vld [vmem:[#allocation6 + $0x24] sm:$0xf]
        %v724 = vld [vmem:[#allocation6 + $0x30] sm:$0xf]
        %v725 = vld [vmem:[#allocation6 + $0x3c] sm:$0xf]
        %v726 = vld [vmem:[#allocation6 + $0x48] sm:$0xf]
        %v727 = vld [vmem:[#allocation6 + $0x54] sm:$0xf]
        %v728 = vld [vmem:[#allocation6 + $0x60] sm:$0xf]
        %v729 = vld [vmem:[#allocation6 + $0x6c] sm:$0xf]
        %v730 = vld [vmem:[#allocation6 + $0x78] sm:$0xf]
        %v731 = vld [vmem:[#allocation6 + $0x84] sm:$0xf]
        %v732 = vld [vmem:[#allocation6 + $0x90] sm:$0xf]
        %v733 = vld [vmem:[#allocation6 + $0x9c] sm:$0xf]
        %v734 = vld [vmem:[#allocation6 + $0xa8] sm:$0xf]
        %v735 = vld [vmem:[#allocation6 + $0xb4] sm:$0xf]
        %v736 = vld [vmem:[#allocation8] sm:$0x1]
        %v738 = vperm.slane %v736, 0
        %v756 = vunpack.c.l.b16 %v720
        %v757 = vunpack.c.l.b16 %v721
        %v758 = vunpack.c.l.b16 %v722
        %v759 = vunpack.c.l.b16 %v723
        %v760 = vunpack.c.l.b16 %v724
        %v761 = vunpack.c.l.b16 %v725
        %v762 = vunpack.c.l.b16 %v726
        %v763 = vunpack.c.l.b16 %v727
        %v764 = vunpack.c.l.b16 %v728
        %v765 = vunpack.c.l.b16 %v729
        %v766 = vunpack.c.l.b16 %v730
        %v767 = vunpack.c.l.b16 %v731
        %v768 = vunpack.c.l.b16 %v732
        %v769 = vunpack.c.l.b16 %v733
        %v770 = vunpack.c.l.b16 %v734
        %v771 = vunpack.c.l.b16 %v735
        %v772 = vpack.c.b16 %v757, %v756
        %v773 = vpack.c.b16 %v759, %v758
        %v774 = vpack.c.b16 %v761, %v760
        %v775 = vpack.c.b16 %v763, %v762
        %v776 = vpack.c.b16 %v765, %v764
        %v777 = vpack.c.b16 %v767, %v766
        %v778 = vpack.c.b16 %v769, %v768
        %v779 = vpack.c.b16 %v771, %v770
        %788 = vmatpush.bf16.msra.mxu0 %v779
        %789 = vmatpush.bf16.msra.mxu0 %v778
        %790 = vmatpush.bf16.msra.mxu0 %v777
        %791 = vmatpush.bf16.msra.mxu0 %v776
        %792 = vmatpush.bf16.msra.mxu0 %v775
        %793 = vmatpush.bf16.msra.mxu0 %v774
        %794 = vmatpush.bf16.msra.mxu0 %v773
        %795 = vmatpush.bf16.msra.mxu0 %v772
        %796 = vmatmul.bf16.gmra.mxu0 %v719
        %v797 = vpop.f32.mrf.mxu0
        %v798 = vadd.f32 %v738, %v797
        %v799 = vpop.f32.mrf.mxu0
        %800 = vdwg.mxu0
        %v801 = vmul.f32 %v798, 0.17677669
        %v802 = vpack.c.bf16 %v801, %v801
        %v803 = vld [vmem:[#allocation2] sm:$0xf]
        %v804 = vld [vmem:[#allocation2 + $0x8] sm:$0xf]
        %v805 = vld [vmem:[#allocation2 + $0x4] sm:$0xf]
        %v806 = vld [vmem:[#allocation2 + $0xc] sm:$0xf]
        %v807 = vld [vmem:[#allocation9] sm:$0xf]
        %v808 = vld [vmem:[#allocation9 + $0x4] sm:$0xf]
        %v809 = vld [vmem:[#allocation9 + $0x8] sm:$0xf]
        %v810 = vld [vmem:[#allocation9 + $0xc] sm:$0xf]
        %v811 = vld [vmem:[#allocation9 + $0x10] sm:$0xf]
        %v812 = vld [vmem:[#allocation9 + $0x14] sm:$0xf]
        %v813 = vld [vmem:[#allocation9 + $0x18] sm:$0xf]
        %v814 = vld [vmem:[#allocation9 + $0x1c] sm:$0xf]
        %v815 = vld [vmem:[#allocation9 + $0x20] sm:$0xf]
        %v816 = vld [vmem:[#allocation9 + $0x24] sm:$0xf]
        %v817 = vld [vmem:[#allocation9 + $0x28] sm:$0xf]
        %v818 = vld [vmem:[#allocation9 + $0x2c] sm:$0xf]
        %v819 = vld [vmem:[#allocation9 + $0x30] sm:$0xf]
        %v820 = vld [vmem:[#allocation9 + $0x34] sm:$0xf]
        %v821 = vld [vmem:[#allocation9 + $0x38] sm:$0xf]
        %v822 = vld [vmem:[#allocation9 + $0x3c] sm:$0xf]
        %v825 = vunpack.c.l.b16 %v803
        %v826 = vunpack.c.l.b16 %v804
        %v827 = vpack.c.b16 %v826, %v825
        %vm828 = vcmask 261120
        %v830 = vsel %vm828, %v802, 0
        %v833 = vsel %vm828, %v827, 0
        %835 = vmatpush.bf16.xpose.msra.mxu0 0
        %836 = vmatpush.bf16.xpose.msra.mxu0 0
        %837 = vmatpush.bf16.xpose.msra.mxu0 0
        %838 = vmatpush.bf16.xpose.msra.mxu0 0
        %839 = vmatpush.bf16.xpose.msra.mxu0 0
        %840 = vmatpush.bf16.xpose.msra.mxu0 0
        %841 = vmatpush.bf16.xpose.msra.mxu0 0
        %842 = vmatpush.bf16.xpose.msra.mxu0 %v833
        %843 = vmatmul.bf16.gmra.mxu0 %v830
        %v844 = vpop.f32.mrf.mxu0
        %v845 = vadd.f32 0.0, %v844
        %v846 = vpop.f32.mrf.mxu0
        %847 = vdwg.mxu0
        %vm848 = vcmask 130048
        %v849 = vsel %vm848, %v845, -inf
        %850 = vmax.xlane.f32.xlu0 %v849
        %v851 = vpop.xlane.xlu0 %850
        %v852 = vsub.f32 %v845, %v851
        %v853 = vmul.f32 %v852, 1.442695
        %v854 = vpow.pop %v853
        %v855 = vsel %vm848, %v854, 0.0
        %856 = vadd.xlane.f32.xlu0 %v855
        %v857 = vpop.xlane.xlu0 %856
        %v858 = vrcp.pop %v857
        %v859 = vmul.f32 %v854, %v858
        %v860 = vpack.c.bf16 %v859, %v859
        %v863 = vunpack.c.l.b16 %v805
        %v864 = vunpack.c.l.b16 %v806
        %v865 = vpack.c.b16 %v864, %v863
        %v868 = vsel %vm848, %v860, 0
        %870 = vmatpush.bf16.msra.mxu0 0
        %871 = vmatpush.bf16.msra.mxu0 0
        %872 = vmatpush.bf16.msra.mxu0 0
        %873 = vmatpush.bf16.msra.mxu0 0
        %874 = vmatpush.bf16.msra.mxu0 0
        %875 = vmatpush.bf16.msra.mxu0 0
        %876 = vmatpush.bf16.msra.mxu0 0
        %877 = vmatpush.bf16.msra.mxu0 %v865
        %878 = vmatmul.bf16.gmra.mxu0 %v868
        %v879 = vpop.f32.mrf.mxu0
        %v880 = vadd.f32 0.0, %v879
        %v881 = vpop.f32.mrf.mxu0
        %882 = vdwg.mxu0
        %v883 = vpack.c.bf16 %v880, %v880
        %v885 = vunpack.c.l.b16 %v802
        %v886 = vpack.c.b16 %v885, %v885
        %887 = vrot.lane.b32.xlu0 %v886, 96
        %v888 = vpop.permute.xlu0 %887
        %889 = vrot.lane.b32.xlu0 %v827, 96
        %v890 = vpop.permute.xlu0 %889
        %v892 = vsel %vm828, %v888, 0
        %v895 = vsel %vm828, %v890, 0
        %897 = vmatpush.bf16.xpose.msra.mxu0 0
        %898 = vmatpush.bf16.xpose.msra.mxu0 0
        %899 = vmatpush.bf16.xpose.msra.mxu0 0
        %900 = vmatpush.bf16.xpose.msra.mxu0 0
        %901 = vmatpush.bf16.xpose.msra.mxu0 0
        %902 = vmatpush.bf16.xpose.msra.mxu0 0
        %903 = vmatpush.bf16.xpose.msra.mxu0 0
        %904 = vmatpush.bf16.xpose.msra.mxu0 %v895
        %905 = vmatmul.bf16.gmra.mxu0 %v892
        %v906 = vpop.f32.mrf.mxu0
        %v907 = vadd.f32 0.0, %v906
        %v908 = vpop.f32.mrf.mxu0
        %909 = vdwg.mxu0
        %v910 = vsel %vm848, %v907, -inf
        %911 = vmax.xlane.f32.xlu0 %v910
        %v912 = vpop.xlane.xlu0 %911
        %v913 = vsub.f32 %v907, %v912
        %v914 = vmul.f32 %v913, 1.442695
        %v915 = vpow.pop %v914
        %v916 = vsel %vm848, %v915, 0.0
        %917 = vadd.xlane.f32.xlu0 %v916
        %v918 = vpop.xlane.xlu0 %917
        %v919 = vrcp.pop %v918
        %v920 = vmul.f32 %v915, %v919
        %v921 = vpack.c.bf16 %v920, %v920
        %922 = vrot.lane.b32.xlu0 %v865, 96
        %v923 = vpop.permute.xlu0 %922
        %v926 = vsel %vm848, %v921, 0
        %928 = vmatpush.bf16.msra.mxu0 0
        %929 = vmatpush.bf16.msra.mxu0 0
        %930 = vmatpush.bf16.msra.mxu0 0
        %931 = vmatpush.bf16.msra.mxu0 0
        %932 = vmatpush.bf16.msra.mxu0 0
        %933 = vmatpush.bf16.msra.mxu0 0
        %934 = vmatpush.bf16.msra.mxu0 0
        %935 = vmatpush.bf16.msra.mxu0 %v923
        %936 = vmatmul.bf16.gmra.mxu0 %v926
        %v937 = vpop.f32.mrf.mxu0
        %v938 = vadd.f32 0.0, %v937
        %v939 = vpop.f32.mrf.mxu0
        %940 = vdwg.mxu0
        %v941 = vpack.c.bf16 %v938, %v938
        %v946 = vunpack.c.l.b16 %v811
        %v947 = vunpack.c.l.b16 %v812
        %v948 = vunpack.c.l.b16 %v813
        %v949 = vunpack.c.l.b16 %v814
        %v950 = vpack.c.b16 %v947, %v946
        %v951 = vpack.c.b16 %v949, %v948
        %v955 = vsel %vm828, %v941, 0
        %957 = vmatpush.bf16.msra.mxu0 0
        %958 = vmatpush.bf16.msra.mxu0 0
        %959 = vmatpush.bf16.msra.mxu0 0
        %960 = vmatpush.bf16.msra.mxu0 0
        %961 = vmatpush.bf16.msra.mxu0 0
        %962 = vmatpush.bf16.msra.mxu0 0
        %963 = vmatpush.bf16.msra.mxu0 %v951
        %964 = vmatpush.bf16.msra.mxu0 %v950
        %965 = vmatmul.bf16.gmra.mxu0 %v955
        %v966 = vpop.f32.mrf.mxu0
        %v967 = vadd.f32 0.0, %v966
        %v968 = vpop.f32.mrf.mxu0
        %969 = vdwg.mxu0
        %v974 = vunpack.c.l.b16 %v807
        %v975 = vunpack.c.l.b16 %v808
        %v976 = vunpack.c.l.b16 %v809
        %v977 = vunpack.c.l.b16 %v810
        %v978 = vpack.c.b16 %v975, %v974
        %v979 = vpack.c.b16 %v977, %v976
        %v983 = vsel %vm828, %v883, 0
        %985 = vmatpush.bf16.msra.mxu0 0
        %986 = vmatpush.bf16.msra.mxu0 0
        %987 = vmatpush.bf16.msra.mxu0 0
        %988 = vmatpush.bf16.msra.mxu0 0
        %989 = vmatpush.bf16.msra.mxu0 0
        %990 = vmatpush.bf16.msra.mxu0 0
        %991 = vmatpush.bf16.msra.mxu0 %v979
        %992 = vmatpush.bf16.msra.mxu0 %v978
        %993 = vmatmul.bf16.gmra.mxu0 %v983
        %v994 = vpop.f32.mrf.mxu0
        %v995 = vadd.f32 %v967, %v994
        %v996 = vpop.f32.mrf.mxu0
        %997 = vdwg.mxu0
        %998 = vrot.lane.b32.xlu0 %v886, 64
        %v999 = vpop.permute.xlu0 %998
        %1000 = vrot.lane.b32.xlu0 %v827, 64
        %v1001 = vpop.permute.xlu0 %1000
        %v1003 = vsel %vm828, %v999, 0
        %v1006 = vsel %vm828, %v1001, 0
        %1008 = vmatpush.bf16.xpose.msra.mxu0 0
        %1009 = vmatpush.bf16.xpose.msra.mxu0 0
        %1010 = vmatpush.bf16.xpose.msra.mxu0 0
        %1011 = vmatpush.bf16.xpose.msra.mxu0 0
        %1012 = vmatpush.bf16.xpose.msra.mxu0 0
        %1013 = vmatpush.bf16.xpose.msra.mxu0 0
        %1014 = vmatpush.bf16.xpose.msra.mxu0 0
        %1015 = vmatpush.bf16.xpose.msra.mxu0 %v1006
        %1016 = vmatmul.bf16.gmra.mxu0 %v1003
        %v1017 = vpop.f32.mrf.mxu0
        %v1018 = vadd.f32 0.0, %v1017
        %v1019 = vpop.f32.mrf.mxu0
        %1020 = vdwg.mxu0
        %v1021 = vsel %vm848, %v1018, -inf
        %1022 = vmax.xlane.f32.xlu0 %v1021
        %v1023 = vpop.xlane.xlu0 %1022
        %v1024 = vsub.f32 %v1018, %v1023
        %v1025 = vmul.f32 %v1024, 1.442695
        %v1026 = vpow.pop %v1025
        %v1027 = vsel %vm848, %v1026, 0.0
        %1028 = vadd.xlane.f32.xlu0 %v1027
        %v1029 = vpop.xlane.xlu0 %1028
        %v1030 = vrcp.pop %v1029
        %v1031 = vmul.f32 %v1026, %v1030
        %v1032 = vpack.c.bf16 %v1031, %v1031
        %1033 = vrot.lane.b32.xlu0 %v865, 64
        %v1034 = vpop.permute.xlu0 %1033
        %v1037 = vsel %vm848, %v1032, 0
        %1039 = vmatpush.bf16.msra.mxu0 0
        %1040 = vmatpush.bf16.msra.mxu0 0
        %1041 = vmatpush.bf16.msra.mxu0 0
        %1042 = vmatpush.bf16.msra.mxu0 0
        %1043 = vmatpush.bf16.msra.mxu0 0
        %1044 = vmatpush.bf16.msra.mxu0 0
        %1045 = vmatpush.bf16.msra.mxu0 0
        %1046 = vmatpush.bf16.msra.mxu0 %v1034
        %1047 = vmatmul.bf16.gmra.mxu0 %v1037
        %v1048 = vpop.f32.mrf.mxu0
        %v1049 = vadd.f32 0.0, %v1048
        %v1050 = vpop.f32.mrf.mxu0
        %1051 = vdwg.mxu0
        %v1052 = vpack.c.bf16 %v1049, %v1049
        %v1057 = vunpack.c.l.b16 %v815
        %v1058 = vunpack.c.l.b16 %v816
        %v1059 = vunpack.c.l.b16 %v817
        %v1060 = vunpack.c.l.b16 %v818
        %v1061 = vpack.c.b16 %v1058, %v1057
        %v1062 = vpack.c.b16 %v1060, %v1059
        %v1066 = vsel %vm828, %v1052, 0
        %1068 = vmatpush.bf16.msra.mxu0 0
        %1069 = vmatpush.bf16.msra.mxu0 0
        %1070 = vmatpush.bf16.msra.mxu0 0
        %1071 = vmatpush.bf16.msra.mxu0 0
        %1072 = vmatpush.bf16.msra.mxu0 0
        %1073 = vmatpush.bf16.msra.mxu0 0
        %1074 = vmatpush.bf16.msra.mxu0 %v1062
        %1075 = vmatpush.bf16.msra.mxu0 %v1061
        %1076 = vmatmul.bf16.gmra.mxu0 %v1066
        %v1077 = vpop.f32.mrf.mxu0
        %v1078 = vadd.f32 0.0, %v1077
        %v1079 = vpop.f32.mrf.mxu0
        %1080 = vdwg.mxu0
        %v1081 = vadd.f32 %v995, %v1078
        %1082 = vrot.lane.b32.xlu0 %v886, 32
        %v1083 = vpop.permute.xlu0 %1082
        %1084 = vrot.lane.b32.xlu0 %v827, 32
        %v1085 = vpop.permute.xlu0 %1084
        %v1087 = vsel %vm828, %v1083, 0
        %v1090 = vsel %vm828, %v1085, 0
        %1092 = vmatpush.bf16.xpose.msra.mxu0 0
        %1093 = vmatpush.bf16.xpose.msra.mxu0 0
        %1094 = vmatpush.bf16.xpose.msra.mxu0 0
        %1095 = vmatpush.bf16.xpose.msra.mxu0 0
        %1096 = vmatpush.bf16.xpose.msra.mxu0 0
        %1097 = vmatpush.bf16.xpose.msra.mxu0 0
        %1098 = vmatpush.bf16.xpose.msra.mxu0 0
        %1099 = vmatpush.bf16.xpose.msra.mxu0 %v1090
        %1100 = vmatmul.bf16.gmra.mxu0 %v1087
        %v1101 = vpop.f32.mrf.mxu0
        %v1102 = vadd.f32 0.0, %v1101
        %v1103 = vpop.f32.mrf.mxu0
        %1104 = vdwg.mxu0
        %v1105 = vsel %vm848, %v1102, -inf
        %1106 = vmax.xlane.f32.xlu0 %v1105
        %v1107 = vpop.xlane.xlu0 %1106
        %v1108 = vsub.f32 %v1102, %v1107
        %v1109 = vmul.f32 %v1108, 1.442695
        %v1110 = vpow.pop %v1109
        %v1111 = vsel %vm848, %v1110, 0.0
        %1112 = vadd.xlane.f32.xlu0 %v1111
        %v1113 = vpop.xlane.xlu0 %1112
        %v1114 = vrcp.pop %v1113
        %v1115 = vmul.f32 %v1110, %v1114
        %v1116 = vpack.c.bf16 %v1115, %v1115
        %1117 = vrot.lane.b32.xlu0 %v865, 32
        %v1118 = vpop.permute.xlu0 %1117
        %v1121 = vsel %vm848, %v1116, 0
        %1123 = vmatpush.bf16.msra.mxu0 0
        %1124 = vmatpush.bf16.msra.mxu0 0
        %1125 = vmatpush.bf16.msra.mxu0 0
        %1126 = vmatpush.bf16.msra.mxu0 0
        %1127 = vmatpush.bf16.msra.mxu0 0
        %1128 = vmatpush.bf16.msra.mxu0 0
        %1129 = vmatpush.bf16.msra.mxu0 0
        %1130 = vmatpush.bf16.msra.mxu0 %v1118
        %1131 = vmatmul.bf16.gmra.mxu0 %v1121
        %v1132 = vpop.f32.mrf.mxu0
        %v1133 = vadd.f32 0.0, %v1132
        %v1134 = vpop.f32.mrf.mxu0
        %1135 = vdwg.mxu0
        %v1136 = vpack.c.bf16 %v1133, %v1133
        %v1141 = vunpack.c.l.b16 %v819
        %v1142 = vunpack.c.l.b16 %v820
        %v1143 = vunpack.c.l.b16 %v821
        %v1144 = vunpack.c.l.b16 %v822
        %v1145 = vpack.c.b16 %v1142, %v1141
        %v1146 = vpack.c.b16 %v1144, %v1143
        %v1150 = vsel %vm828, %v1136, 0
        %1152 = vmatpush.bf16.msra.mxu0 0
        %1153 = vmatpush.bf16.msra.mxu0 0
        %1154 = vmatpush.bf16.msra.mxu0 0
        %1155 = vmatpush.bf16.msra.mxu0 0
        %1156 = vmatpush.bf16.msra.mxu0 0
        %1157 = vmatpush.bf16.msra.mxu0 0
        %1158 = vmatpush.bf16.msra.mxu0 %v1146
        %1159 = vmatpush.bf16.msra.mxu0 %v1145
        %1160 = vmatmul.bf16.gmra.mxu0 %v1150
        %v1161 = vpop.f32.mrf.mxu0
        %v1162 = vadd.f32 0.0, %v1161
        %v1163 = vpop.f32.mrf.mxu0
        %1164 = vdwg.mxu0
        %v1165 = vadd.f32 %v1081, %v1162
        %v1166 = vld [vmem:[%s4] sm:$0x1]
        %v1168 = vperm.slane %v1166, 0
        %v1170 = vadd.f32 %v1165, %v1168
        %v1171 = vadd.f32 %v687, %v1170
        %1172 = vadd.xlane.f32.xlu0 %v1171
        %v1173 = vpop.xlane.xlu0 %1172
        %v1174 = vmul.f32 %v1173, %v696
        %v1175 = vsub.f32 %v1171, %v1174
        %v1176 = vmul.f32 %v1175, %v1175
        %1177 = vadd.xlane.f32.xlu0 %v1176
        %v1178 = vpop.xlane.xlu0 %1177
        %v1179 = vmul.f32 %v1178, %v696
        %v1180 = vadd.f32 %v1179, 1e-05
        %v1181 = vrsqrt.pop %v1180
        %v1182 = vmul.f32 %v1181, %v1180
        %v1183 = vmul.f32 %v1182, %v1181
        %v1184 = vmul.f32 0.5, %v1183
        %v1185 = vsub.f32 1.5, %v1184
        %v1186 = vmul.f32 %v1181, %v1185
        %vm1187 = vweird.f32 %v1180
        %vm1188 = vweird.f32 %v1181
        %vm1189 = vmor %vm1187, %vm1188
        %v1190 = vsel %vm1189, %v1181, %v1186
        %v1191 = vmul.f32 %v1175, %v1190
        %v1192 = vperm.slane %v490, 2
        %v1193 = vmul.f32 %v1191, %v1192
        %v1194 = vperm.slane %v490, 3
        %v1195 = vadd.f32 %v1193, %v1194
        %1196 = vadd.xlane.f32.xlu0 %v1195
        %v1197 = vpop.xlane.xlu0 %1196
        %v1198 = vmul.f32 %v1197, %v696
        %v1199 = vsub.f32 %v1195, %v1198
        %v1200 = vmul.f32 %v1199, %v1199
        %1201 = vadd.xlane.f32.xlu0 %v1200
        %v1202 = vpop.xlane.xlu0 %1201
        %v1203 = vmul.f32 %v1202, %v696
        %v1204 = vadd.f32 %v1203, 1e-05
        %v1205 = vrsqrt.pop %v1204
        %v1206 = vmul.f32 %v1205, %v1204
        %v1207 = vmul.f32 %v1206, %v1205
        %v1208 = vmul.f32 0.5, %v1207
        %v1209 = vsub.f32 1.5, %v1208
        %v1210 = vmul.f32 %v1205, %v1209
        %vm1211 = vweird.f32 %v1204
        %vm1212 = vweird.f32 %v1205
        %vm1213 = vmor %vm1211, %vm1212
        %v1214 = vsel %vm1213, %v1205, %v1210
        %v1215 = vmul.f32 %v1199, %v1214
        %v1216 = vperm.slane %v490, 4
        %v1217 = vmul.f32 %v1215, %v1216
        %v1218 = vperm.slane %v490, 5
        %v1219 = vadd.f32 %v1217, %v1218
        %v1220 = vpack.c.bf16 %v1219, %v1219
        %v1221 = vld [vmem:[#allocation12] sm:$0xff]
        %v1222 = vld [vmem:[#allocation12 + $0x10] sm:$0xff]
        %v1223 = vld [vmem:[#allocation12 + $0x20] sm:$0xff]
        %v1224 = vld [vmem:[#allocation12 + $0x30] sm:$0xff]
        %v1225 = vld [vmem:[#allocation12 + $0x40] sm:$0xff]
        %v1226 = vld [vmem:[#allocation12 + $0x50] sm:$0xff]
        %v1227 = vld [vmem:[#allocation12 + $0x60] sm:$0xff]
        %v1228 = vld [vmem:[#allocation12 + $0x70] sm:$0xff]
        %v1229 = vld [vmem:[#allocation12 + $0x80] sm:$0xff]
        %v1230 = vld [vmem:[#allocation12 + $0x90] sm:$0xff]
        %v1231 = vld [vmem:[#allocation12 + $0xa0] sm:$0xff]
        %v1232 = vld [vmem:[#allocation12 + $0xb0] sm:$0xff]
        %v1233 = vld [vmem:[#allocation12 + $0xc0] sm:$0xff]
        %v1234 = vld [vmem:[#allocation12 + $0xd0] sm:$0xff]
        %v1235 = vld [vmem:[#allocation12 + $0xe0] sm:$0xff]
        %v1236 = vld [vmem:[#allocation12 + $0xf0] sm:$0xff]
        %v1237 = vld [vmem:[%s7] sm:$0x3]
        %v1239 = vperm.slane %v1237, 0
        %v1240 = vperm.slane %v1237, 1
        %v1259 = vunpack.c.l.b16 %v1221
        %v1260 = vunpack.c.h.b16 %v1221
        %v1261 = vunpack.c.l.b16 %v1222
        %v1262 = vunpack.c.h.b16 %v1222
        %v1263 = vunpack.c.l.b16 %v1223
        %v1264 = vunpack.c.h.b16 %v1223
        %v1265 = vunpack.c.l.b16 %v1224
        %v1266 = vunpack.c.h.b16 %v1224
        %v1267 = vunpack.c.l.b16 %v1225
        %v1268 = vunpack.c.h.b16 %v1225
        %v1269 = vunpack.c.l.b16 %v1226
        %v1270 = vunpack.c.h.b16 %v1226
        %v1271 = vunpack.c.l.b16 %v1227
        %v1272 = vunpack.c.h.b16 %v1227
        %v1273 = vunpack.c.l.b16 %v1228
        %v1274 = vunpack.c.h.b16 %v1228
        %v1275 = vunpack.c.l.b16 %v1229
        %v1276 = vunpack.c.h.b16 %v1229
        %v1277 = vunpack.c.l.b16 %v1230
        %v1278 = vunpack.c.h.b16 %v1230
        %v1279 = vunpack.c.l.b16 %v1231
        %v1280 = vunpack.c.h.b16 %v1231
        %v1281 = vunpack.c.l.b16 %v1232
        %v1282 = vunpack.c.h.b16 %v1232
        %v1283 = vunpack.c.l.b16 %v1233
        %v1284 = vunpack.c.h.b16 %v1233
        %v1285 = vunpack.c.l.b16 %v1234
        %v1286 = vunpack.c.h.b16 %v1234
        %v1287 = vunpack.c.l.b16 %v1235
        %v1288 = vunpack.c.h.b16 %v1235
        %v1289 = vunpack.c.l.b16 %v1236
        %v1290 = vunpack.c.h.b16 %v1236
        %v1291 = vpack.c.b16 %v1261, %v1259
        %v1292 = vpack.c.b16 %v1262, %v1260
        %v1293 = vpack.c.b16 %v1265, %v1263
        %v1294 = vpack.c.b16 %v1266, %v1264
        %v1295 = vpack.c.b16 %v1269, %v1267
        %v1296 = vpack.c.b16 %v1270, %v1268
        %v1297 = vpack.c.b16 %v1273, %v1271
        %v1298 = vpack.c.b16 %v1274, %v1272
        %v1299 = vpack.c.b16 %v1277, %v1275
        %v1300 = vpack.c.b16 %v1278, %v1276
        %v1301 = vpack.c.b16 %v1281, %v1279
        %v1302 = vpack.c.b16 %v1282, %v1280
        %v1303 = vpack.c.b16 %v1285, %v1283
        %v1304 = vpack.c.b16 %v1286, %v1284
        %v1305 = vpack.c.b16 %v1289, %v1287
        %v1306 = vpack.c.b16 %v1290, %v1288
        %1323 = vmatpush.bf16.msra.mxu0 %v1305
        %1324 = vmatpush.bf16.msra.mxu0 %v1303
        %1325 = vmatpush.bf16.msra.mxu0 %v1301
        %1326 = vmatpush.bf16.msra.mxu0 %v1299
        %1327 = vmatpush.bf16.msra.mxu0 %v1297
        %1328 = vmatpush.bf16.msra.mxu0 %v1295
        %1329 = vmatpush.bf16.msra.mxu0 %v1293
        %1330 = vmatpush.bf16.msra.mxu0 %v1291
        %1331 = vmatmul.bf16.gmra.mxu0 %v1220
        %v1332 = vpop.f32.mrf.mxu0
        %v1333 = vadd.f32 %v1239, %v1332
        %v1334 = vpop.f32.mrf.mxu0
        %1335 = vdwg.mxu0
        %1336 = vmatpush.bf16.msra.mxu0 %v1306
        %1337 = vmatpush.bf16.msra.mxu0 %v1304
        %1338 = vmatpush.bf16.msra.mxu0 %v1302
        %1339 = vmatpush.bf16.msra.mxu0 %v1300
        %1340 = vmatpush.bf16.msra.mxu0 %v1298
        %1341 = vmatpush.bf16.msra.mxu0 %v1296
        %1342 = vmatpush.bf16.msra.mxu0 %v1294
        %1343 = vmatpush.bf16.msra.mxu0 %v1292
        %1344 = vmatmul.bf16.gmra.mxu0 %v1220
        %v1345 = vpop.f32.mrf.mxu0
        %v1346 = vadd.f32 %v1240, %v1345
        %v1347 = vpop.f32.mrf.mxu0
        %1348 = vdwg.mxu0
        %v1349 = vxor.u32 %v1333, 2147483648
        %v1350 = vxor.u32 %v1346, 2147483648
        %v1351 = vmul.f32 %v1349, 1.442695
        %v1352 = vpow.pop %v1351
        %v1353 = vmul.f32 %v1350, 1.442695
        %v1354 = vpow.pop %v1353
        %v1355 = vadd.f32 %v1352, 1.0
        %v1356 = vadd.f32 %v1354, 1.0
        %v1357 = vrcp.pop %v1355
        %v1358 = vmul.f32 %v1355, %v1357
        %v1359 = vsub.f32 1.0, %v1358
        %v1360 = vmul.f32 %v1357, %v1359
        %v1361 = vadd.f32 %v1357, %v1360
        %vm1362 = vweird.f32 %v1355
        %vm1363 = vweird.f32 %v1357
        %vm1364 = vmor %vm1362, %vm1363
        %v1365 = vsel %vm1364, %v1357, %v1361
        %v1366 = vand.u32 2147483647, %v1355
        %vm1367 = vcmp.eq.f32.partialorder %v1366, 8.507059e+37
        %v1368 = vand.u32 %v1355, 2147483648
        %v1369 = vor.u32 1.1754944e-38, %v1368
        %v1370 = vsel %vm1367, %v1369, %v1365
        %v1371 = vmul.f32 1.0, %v1370
        %v1372 = vrcp.pop %v1356
        %v1373 = vmul.f32 %v1356, %v1372
        %v1374 = vsub.f32 1.0, %v1373
        %v1375 = vmul.f32 %v1372, %v1374
        %v1376 = vadd.f32 %v1372, %v1375
        %vm1377 = vweird.f32 %v1356
        %vm1378 = vweird.f32 %v1372
        %vm1379 = vmor %vm1377, %vm1378
        %v1380 = vsel %vm1379, %v1372, %v1376
        %v1381 = vand.u32 2147483647, %v1356
        %vm1382 = vcmp.eq.f32.partialorder %v1381, 8.507059e+37
        %v1383 = vand.u32 %v1356, 2147483648
        %v1384 = vor.u32 1.1754944e-38, %v1383
        %v1385 = vsel %vm1382, %v1384, %v1380
        %v1386 = vmul.f32 1.0, %v1385
        %v1387 = vmul.f32 %v1333, %v1371
        %v1388 = vmul.f32 %v1346, %v1386
        %v1389 = vpack.c.bf16 %v1387, %v1387
        %v1390 = vpack.c.bf16 %v1388, %v1388
        %v1391 = vld [vmem:[#allocation14] sm:$0xf]
        %v1392 = vld [vmem:[#allocation14 + $0x4] sm:$0xf]
        %v1393 = vld [vmem:[#allocation14 + $0x8] sm:$0xf]
        %v1394 = vld [vmem:[#allocation14 + $0xc] sm:$0xf]
        %v1395 = vld [vmem:[#allocation14 + $0x10] sm:$0xf]
        %v1396 = vld [vmem:[#allocation14 + $0x14] sm:$0xf]
        %v1397 = vld [vmem:[#allocation14 + $0x18] sm:$0xf]
        %v1398 = vld [vmem:[#allocation14 + $0x1c] sm:$0xf]
        %v1399 = vld [vmem:[#allocation14 + $0x20] sm:$0xf]
        %v1400 = vld [vmem:[#allocation14 + $0x24] sm:$0xf]
        %v1401 = vld [vmem:[#allocation14 + $0x28] sm:$0xf]
        %v1402 = vld [vmem:[#allocation14 + $0x2c] sm:$0xf]
        %v1403 = vld [vmem:[#allocation14 + $0x30] sm:$0xf]
        %v1404 = vld [vmem:[#allocation14 + $0x34] sm:$0xf]
        %v1405 = vld [vmem:[#allocation14 + $0x38] sm:$0xf]
        %v1406 = vld [vmem:[#allocation14 + $0x3c] sm:$0xf]
        %v1407 = vld [vmem:[#allocation14 + $0x40] sm:$0xf]
        %v1408 = vld [vmem:[#allocation14 + $0x44] sm:$0xf]
        %v1409 = vld [vmem:[#allocation14 + $0x48] sm:$0xf]
        %v1410 = vld [vmem:[#allocation14 + $0x4c] sm:$0xf]
        %v1411 = vld [vmem:[#allocation14 + $0x50] sm:$0xf]
        %v1412 = vld [vmem:[#allocation14 + $0x54] sm:$0xf]
        %v1413 = vld [vmem:[#allocation14 + $0x58] sm:$0xf]
        %v1414 = vld [vmem:[#allocation14 + $0x5c] sm:$0xf]
        %v1415 = vld [vmem:[#allocation14 + $0x60] sm:$0xf]
        %v1416 = vld [vmem:[#allocation14 + $0x64] sm:$0xf]
        %v1417 = vld [vmem:[#allocation14 + $0x68] sm:$0xf]
        %v1418 = vld [vmem:[#allocation14 + $0x6c] sm:$0xf]
        %v1419 = vld [vmem:[#allocation14 + $0x70] sm:$0xf]
        %v1420 = vld [vmem:[#allocation14 + $0x74] sm:$0xf]
        %v1421 = vld [vmem:[#allocation14 + $0x78] sm:$0xf]
        %v1422 = vld [vmem:[#allocation14 + $0x7c] sm:$0xf]
        %v1423 = vld [vmem:[#allocation12 + $0x8] sm:$0xff]
        %v1424 = vld [vmem:[#allocation12 + $0x18] sm:$0xff]
        %v1425 = vld [vmem:[#allocation12 + $0x28] sm:$0xff]
        %v1426 = vld [vmem:[#allocation12 + $0x38] sm:$0xff]
        %v1427 = vld [vmem:[#allocation12 + $0x48] sm:$0xff]
        %v1428 = vld [vmem:[#allocation12 + $0x58] sm:$0xff]
        %v1429 = vld [vmem:[#allocation12 + $0x68] sm:$0xff]
        %v1430 = vld [vmem:[#allocation12 + $0x78] sm:$0xff]
        %v1431 = vld [vmem:[#allocation12 + $0x88] sm:$0xff]
        %v1432 = vld [vmem:[#allocation12 + $0x98] sm:$0xff]
        %v1433 = vld [vmem:[#allocation12 + $0xa8] sm:$0xff]
        %v1434 = vld [vmem:[#allocation12 + $0xb8] sm:$0xff]
        %v1435 = vld [vmem:[#allocation12 + $0xc8] sm:$0xff]
        %v1436 = vld [vmem:[#allocation12 + $0xd8] sm:$0xff]
        %v1437 = vld [vmem:[#allocation12 + $0xe8] sm:$0xff]
        %v1438 = vld [vmem:[#allocation12 + $0xf8] sm:$0xff]
        %v1439 = vld [vmem:[%s7 + $0x2] sm:$0x3]
        %v1441 = vperm.slane %v1439, 0
        %v1442 = vperm.slane %v1439, 1
        %v1461 = vunpack.c.l.b16 %v1423
        %v1462 = vunpack.c.h.b16 %v1423
        %v1463 = vunpack.c.l.b16 %v1424
        %v1464 = vunpack.c.h.b16 %v1424
        %v1465 = vunpack.c.l.b16 %v1425
        %v1466 = vunpack.c.h.b16 %v1425
        %v1467 = vunpack.c.l.b16 %v1426
        %v1468 = vunpack.c.h.b16 %v1426
        %v1469 = vunpack.c.l.b16 %v1427
        %v1470 = vunpack.c.h.b16 %v1427
        %v1471 = vunpack.c.l.b16 %v1428
        %v1472 = vunpack.c.h.b16 %v1428
        %v1473 = vunpack.c.l.b16 %v1429
        %v1474 = vunpack.c.h.b16 %v1429
        %v1475 = vunpack.c.l.b16 %v1430
        %v1476 = vunpack.c.h.b16 %v1430
        %v1477 = vunpack.c.l.b16 %v1431
        %v1478 = vunpack.c.h.b16 %v1431
        %v1479 = vunpack.c.l.b16 %v1432
        %v1480 = vunpack.c.h.b16 %v1432
        %v1481 = vunpack.c.l.b16 %v1433
        %v1482 = vunpack.c.h.b16 %v1433
        %v1483 = vunpack.c.l.b16 %v1434
        %v1484 = vunpack.c.h.b16 %v1434
        %v1485 = vunpack.c.l.b16 %v1435
        %v1486 = vunpack.c.h.b16 %v1435
        %v1487 = vunpack.c.l.b16 %v1436
        %v1488 = vunpack.c.h.b16 %v1436
        %v1489 = vunpack.c.l.b16 %v1437
        %v1490 = vunpack.c.h.b16 %v1437
        %v1491 = vunpack.c.l.b16 %v1438
        %v1492 = vunpack.c.h.b16 %v1438
        %v1493 = vpack.c.b16 %v1463, %v1461
        %v1494 = vpack.c.b16 %v1464, %v1462
        %v1495 = vpack.c.b16 %v1467, %v1465
        %v1496 = vpack.c.b16 %v1468, %v1466
        %v1497 = vpack.c.b16 %v1471, %v1469
        %v1498 = vpack.c.b16 %v1472, %v1470
        %v1499 = vpack.c.b16 %v1475, %v1473
        %v1500 = vpack.c.b16 %v1476, %v1474
        %v1501 = vpack.c.b16 %v1479, %v1477
        %v1502 = vpack.c.b16 %v1480, %v1478
        %v1503 = vpack.c.b16 %v1483, %v1481
        %v1504 = vpack.c.b16 %v1484, %v1482
        %v1505 = vpack.c.b16 %v1487, %v1485
        %v1506 = vpack.c.b16 %v1488, %v1486
        %v1507 = vpack.c.b16 %v1491, %v1489
        %v1508 = vpack.c.b16 %v1492, %v1490
        %1525 = vmatpush.bf16.msra.mxu0 %v1507
        %1526 = vmatpush.bf16.msra.mxu0 %v1505
        %1527 = vmatpush.bf16.msra.mxu0 %v1503
        %1528 = vmatpush.bf16.msra.mxu0 %v1501
        %1529 = vmatpush.bf16.msra.mxu0 %v1499
        %1530 = vmatpush.bf16.msra.mxu0 %v1497
        %1531 = vmatpush.bf16.msra.mxu0 %v1495
        %1532 = vmatpush.bf16.msra.mxu0 %v1493
        %1533 = vmatmul.bf16.gmra.mxu0 %v1220
        %v1534 = vpop.f32.mrf.mxu0
        %v1535 = vadd.f32 %v1441, %v1534
        %v1536 = vpop.f32.mrf.mxu0
        %1537 = vdwg.mxu0
        %1538 = vmatpush.bf16.msra.mxu0 %v1508
        %1539 = vmatpush.bf16.msra.mxu0 %v1506
        %1540 = vmatpush.bf16.msra.mxu0 %v1504
        %1541 = vmatpush.bf16.msra.mxu0 %v1502
        %1542 = vmatpush.bf16.msra.mxu0 %v1500
        %1543 = vmatpush.bf16.msra.mxu0 %v1498
        %1544 = vmatpush.bf16.msra.mxu0 %v1496
        %1545 = vmatpush.bf16.msra.mxu0 %v1494
        %1546 = vmatmul.bf16.gmra.mxu0 %v1220
        %v1547 = vpop.f32.mrf.mxu0
        %v1548 = vadd.f32 %v1442, %v1547
        %v1549 = vpop.f32.mrf.mxu0
        %1550 = vdwg.mxu0
        %v1551 = vxor.u32 %v1535, 2147483648
        %v1552 = vxor.u32 %v1548, 2147483648
        %v1553 = vmul.f32 %v1551, 1.442695
        %v1554 = vpow.pop %v1553
        %v1555 = vmul.f32 %v1552, 1.442695
        %v1556 = vpow.pop %v1555
        %v1557 = vadd.f32 %v1554, 1.0
        %v1558 = vadd.f32 %v1556, 1.0
        %v1559 = vrcp.pop %v1557
        %v1560 = vmul.f32 %v1557, %v1559
        %v1561 = vsub.f32 1.0, %v1560
        %v1562 = vmul.f32 %v1559, %v1561
        %v1563 = vadd.f32 %v1559, %v1562
        %vm1564 = vweird.f32 %v1557
        %vm1565 = vweird.f32 %v1559
        %vm1566 = vmor %vm1564, %vm1565
        %v1567 = vsel %vm1566, %v1559, %v1563
        %v1568 = vand.u32 2147483647, %v1557
        %vm1569 = vcmp.eq.f32.partialorder %v1568, 8.507059e+37
        %v1570 = vand.u32 %v1557, 2147483648
        %v1571 = vor.u32 1.1754944e-38, %v1570
        %v1572 = vsel %vm1569, %v1571, %v1567
        %v1573 = vmul.f32 1.0, %v1572
        %v1574 = vrcp.pop %v1558
        %v1575 = vmul.f32 %v1558, %v1574
        %v1576 = vsub.f32 1.0, %v1575
        %v1577 = vmul.f32 %v1574, %v1576
        %v1578 = vadd.f32 %v1574, %v1577
        %vm1579 = vweird.f32 %v1558
        %vm1580 = vweird.f32 %v1574
        %vm1581 = vmor %vm1579, %vm1580
        %v1582 = vsel %vm1581, %v1574, %v1578
        %v1583 = vand.u32 2147483647, %v1558
        %vm1584 = vcmp.eq.f32.partialorder %v1583, 8.507059e+37
        %v1585 = vand.u32 %v1558, 2147483648
        %v1586 = vor.u32 1.1754944e-38, %v1585
        %v1587 = vsel %vm1584, %v1586, %v1582
        %v1588 = vmul.f32 1.0, %v1587
        %v1589 = vmul.f32 %v1535, %v1573
        %v1590 = vmul.f32 %v1548, %v1588
        %v1591 = vpack.c.bf16 %v1589, %v1589
        %v1592 = vpack.c.bf16 %v1590, %v1590
        %v1593 = vld [vmem:[#allocation14 + $0x80] sm:$0xf]
        %v1594 = vld [vmem:[#allocation14 + $0x84] sm:$0xf]
        %v1595 = vld [vmem:[#allocation14 + $0x88] sm:$0xf]
        %v1596 = vld [vmem:[#allocation14 + $0x8c] sm:$0xf]
        %v1597 = vld [vmem:[#allocation14 + $0x90] sm:$0xf]
        %v1598 = vld [vmem:[#allocation14 + $0x94] sm:$0xf]
        %v1599 = vld [vmem:[#allocation14 + $0x98] sm:$0xf]
        %v1600 = vld [vmem:[#allocation14 + $0x9c] sm:$0xf]
        %v1601 = vld [vmem:[#allocation14 + $0xa0] sm:$0xf]
        %v1602 = vld [vmem:[#allocation14 + $0xa4] sm:$0xf]
        %v1603 = vld [vmem:[#allocation14 + $0xa8] sm:$0xf]
        %v1604 = vld [vmem:[#allocation14 + $0xac] sm:$0xf]
        %v1605 = vld [vmem:[#allocation14 + $0xb0] sm:$0xf]
        %v1606 = vld [vmem:[#allocation14 + $0xb4] sm:$0xf]
        %v1607 = vld [vmem:[#allocation14 + $0xb8] sm:$0xf]
        %v1608 = vld [vmem:[#allocation14 + $0xbc] sm:$0xf]
        %v1609 = vld [vmem:[#allocation14 + $0xc0] sm:$0xf]
        %v1610 = vld [vmem:[#allocation14 + $0xc4] sm:$0xf]
        %v1611 = vld [vmem:[#allocation14 + $0xc8] sm:$0xf]
        %v1612 = vld [vmem:[#allocation14 + $0xcc] sm:$0xf]
        %v1613 = vld [vmem:[#allocation14 + $0xd0] sm:$0xf]
        %v1614 = vld [vmem:[#allocation14 + $0xd4] sm:$0xf]
        %v1615 = vld [vmem:[#allocation14 + $0xd8] sm:$0xf]
        %v1616 = vld [vmem:[#allocation14 + $0xdc] sm:$0xf]
        %v1617 = vld [vmem:[#allocation14 + $0xe0] sm:$0xf]
        %v1618 = vld [vmem:[#allocation14 + $0xe4] sm:$0xf]
        %v1619 = vld [vmem:[#allocation14 + $0xe8] sm:$0xf]
        %v1620 = vld [vmem:[#allocation14 + $0xec] sm:$0xf]
        %v1621 = vld [vmem:[#allocation14 + $0xf0] sm:$0xf]
        %v1622 = vld [vmem:[#allocation14 + $0xf4] sm:$0xf]
        %v1623 = vld [vmem:[#allocation14 + $0xf8] sm:$0xf]
        %v1624 = vld [vmem:[#allocation14 + $0xfc] sm:$0xf]
        %v1657 = vunpack.c.l.b16 %v1593
        %v1658 = vunpack.c.l.b16 %v1594
        %v1659 = vunpack.c.l.b16 %v1595
        %v1660 = vunpack.c.l.b16 %v1596
        %v1661 = vunpack.c.l.b16 %v1597
        %v1662 = vunpack.c.l.b16 %v1598
        %v1663 = vunpack.c.l.b16 %v1599
        %v1664 = vunpack.c.l.b16 %v1600
        %v1665 = vunpack.c.l.b16 %v1601
        %v1666 = vunpack.c.l.b16 %v1602
        %v1667 = vunpack.c.l.b16 %v1603
        %v1668 = vunpack.c.l.b16 %v1604
        %v1669 = vunpack.c.l.b16 %v1605
        %v1670 = vunpack.c.l.b16 %v1606
        %v1671 = vunpack.c.l.b16 %v1607
        %v1672 = vunpack.c.l.b16 %v1608
        %v1673 = vunpack.c.l.b16 %v1609
        %v1674 = vunpack.c.l.b16 %v1610
        %v1675 = vunpack.c.l.b16 %v1611
        %v1676 = vunpack.c.l.b16 %v1612
        %v1677 = vunpack.c.l.b16 %v1613
        %v1678 = vunpack.c.l.b16 %v1614
        %v1679 = vunpack.c.l.b16 %v1615
        %v1680 = vunpack.c.l.b16 %v1616
        %v1681 = vunpack.c.l.b16 %v1617
        %v1682 = vunpack.c.l.b16 %v1618
        %v1683 = vunpack.c.l.b16 %v1619
        %v1684 = vunpack.c.l.b16 %v1620
        %v1685 = vunpack.c.l.b16 %v1621
        %v1686 = vunpack.c.l.b16 %v1622
        %v1687 = vunpack.c.l.b16 %v1623
        %v1688 = vunpack.c.l.b16 %v1624
        %v1689 = vpack.c.b16 %v1658, %v1657
        %v1690 = vpack.c.b16 %v1660, %v1659
        %v1691 = vpack.c.b16 %v1662, %v1661
        %v1692 = vpack.c.b16 %v1664, %v1663
        %v1693 = vpack.c.b16 %v1666, %v1665
        %v1694 = vpack.c.b16 %v1668, %v1667
        %v1695 = vpack.c.b16 %v1670, %v1669
        %v1696 = vpack.c.b16 %v1672, %v1671
        %v1697 = vpack.c.b16 %v1674, %v1673
        %v1698 = vpack.c.b16 %v1676, %v1675
        %v1699 = vpack.c.b16 %v1678, %v1677
        %v1700 = vpack.c.b16 %v1680, %v1679
        %v1701 = vpack.c.b16 %v1682, %v1681
        %v1702 = vpack.c.b16 %v1684, %v1683
        %v1703 = vpack.c.b16 %v1686, %v1685
        %v1704 = vpack.c.b16 %v1688, %v1687
        %1721 = vmatpush.bf16.msra.mxu0 %v1696
        %1722 = vmatpush.bf16.msra.mxu0 %v1695
        %1723 = vmatpush.bf16.msra.mxu0 %v1694
        %1724 = vmatpush.bf16.msra.mxu0 %v1693
        %1725 = vmatpush.bf16.msra.mxu0 %v1692
        %1726 = vmatpush.bf16.msra.mxu0 %v1691
        %1727 = vmatpush.bf16.msra.mxu0 %v1690
        %1728 = vmatpush.bf16.msra.mxu0 %v1689
        %1729 = vmatmul.bf16.gmra.mxu0 %v1591
        %v1730 = vpop.f32.mrf.mxu0
        %v1731 = vadd.f32 0.0, %v1730
        %v1732 = vpop.f32.mrf.mxu0
        %1733 = vdwg.mxu0
        %1734 = vmatpush.bf16.msra.mxu0 %v1704
        %1735 = vmatpush.bf16.msra.mxu0 %v1703
        %1736 = vmatpush.bf16.msra.mxu0 %v1702
        %1737 = vmatpush.bf16.msra.mxu0 %v1701
        %1738 = vmatpush.bf16.msra.mxu0 %v1700
        %1739 = vmatpush.bf16.msra.mxu0 %v1699
        %1740 = vmatpush.bf16.msra.mxu0 %v1698
        %1741 = vmatpush.bf16.msra.mxu0 %v1697
        %1742 = vmatmul.bf16.gmra.mxu0 %v1592
        %v1743 = vpop.f32.mrf.mxu0
        %v1744 = vadd.f32 %v1731, %v1743
        %v1745 = vpop.f32.mrf.mxu0
        %1746 = vdwg.mxu0
        %v1779 = vunpack.c.l.b16 %v1391
        %v1780 = vunpack.c.l.b16 %v1392
        %v1781 = vunpack.c.l.b16 %v1393
        %v1782 = vunpack.c.l.b16 %v1394
        %v1783 = vunpack.c.l.b16 %v1395
        %v1784 = vunpack.c.l.b16 %v1396
        %v1785 = vunpack.c.l.b16 %v1397
        %v1786 = vunpack.c.l.b16 %v1398
        %v1787 = vunpack.c.l.b16 %v1399
        %v1788 = vunpack.c.l.b16 %v1400
        %v1789 = vunpack.c.l.b16 %v1401
        %v1790 = vunpack.c.l.b16 %v1402
        %v1791 = vunpack.c.l.b16 %v1403
        %v1792 = vunpack.c.l.b16 %v1404
        %v1793 = vunpack.c.l.b16 %v1405
        %v1794 = vunpack.c.l.b16 %v1406
        %v1795 = vunpack.c.l.b16 %v1407
        %v1796 = vunpack.c.l.b16 %v1408
        %v1797 = vunpack.c.l.b16 %v1409
        %v1798 = vunpack.c.l.b16 %v1410
        %v1799 = vunpack.c.l.b16 %v1411
        %v1800 = vunpack.c.l.b16 %v1412
        %v1801 = vunpack.c.l.b16 %v1413
        %v1802 = vunpack.c.l.b16 %v1414
        %v1803 = vunpack.c.l.b16 %v1415
        %v1804 = vunpack.c.l.b16 %v1416
        %v1805 = vunpack.c.l.b16 %v1417
        %v1806 = vunpack.c.l.b16 %v1418
        %v1807 = vunpack.c.l.b16 %v1419
        %v1808 = vunpack.c.l.b16 %v1420
        %v1809 = vunpack.c.l.b16 %v1421
        %v1810 = vunpack.c.l.b16 %v1422
        %v1811 = vpack.c.b16 %v1780, %v1779
        %v1812 = vpack.c.b16 %v1782, %v1781
        %v1813 = vpack.c.b16 %v1784, %v1783
        %v1814 = vpack.c.b16 %v1786, %v1785
        %v1815 = vpack.c.b16 %v1788, %v1787
        %v1816 = vpack.c.b16 %v1790, %v1789
        %v1817 = vpack.c.b16 %v1792, %v1791
        %v1818 = vpack.c.b16 %v1794, %v1793
        %v1819 = vpack.c.b16 %v1796, %v1795
        %v1820 = vpack.c.b16 %v1798, %v1797
        %v1821 = vpack.c.b16 %v1800, %v1799
        %v1822 = vpack.c.b16 %v1802, %v1801
        %v1823 = vpack.c.b16 %v1804, %v1803
        %v1824 = vpack.c.b16 %v1806, %v1805
        %v1825 = vpack.c.b16 %v1808, %v1807
        %v1826 = vpack.c.b16 %v1810, %v1809
        %1843 = vmatpush.bf16.msra.mxu0 %v1818
        %1844 = vmatpush.bf16.msra.mxu0 %v1817
        %1845 = vmatpush.bf16.msra.mxu0 %v1816
        %1846 = vmatpush.bf16.msra.mxu0 %v1815
        %1847 = vmatpush.bf16.msra.mxu0 %v1814
        %1848 = vmatpush.bf16.msra.mxu0 %v1813
        %1849 = vmatpush.bf16.msra.mxu0 %v1812
        %1850 = vmatpush.bf16.msra.mxu0 %v1811
        %1851 = vmatmul.bf16.gmra.mxu0 %v1389
        %v1852 = vpop.f32.mrf.mxu0
        %v1853 = vadd.f32 %v1744, %v1852
        %v1854 = vpop.f32.mrf.mxu0
        %1855 = vdwg.mxu0
        %1856 = vmatpush.bf16.msra.mxu0 %v1826
        %1857 = vmatpush.bf16.msra.mxu0 %v1825
        %1858 = vmatpush.bf16.msra.mxu0 %v1824
        %1859 = vmatpush.bf16.msra.mxu0 %v1823
        %1860 = vmatpush.bf16.msra.mxu0 %v1822
        %1861 = vmatpush.bf16.msra.mxu0 %v1821
        %1862 = vmatpush.bf16.msra.mxu0 %v1820
        %1863 = vmatpush.bf16.msra.mxu0 %v1819
        %1864 = vmatmul.bf16.gmra.mxu0 %v1390
        %v1865 = vpop.f32.mrf.mxu0
        %v1866 = vadd.f32 %v1853, %v1865
        %v1867 = vpop.f32.mrf.mxu0
        %1868 = vdwg.mxu0
        %v1869 = vld [vmem:[%s9] sm:$0x1]
        %v1871 = vperm.slane %v1869, 0
        %v1873 = vadd.f32 %v1866, %v1871
        %v1874 = vmul.f32 %v1873, 0.5
        %v1875 = vadd.f32 %v1195, %v1874
        %1876 = vadd.xlane.f32.xlu0 %v1875
        %v1877 = vpop.xlane.xlu0 %1876
        %v1878 = vmul.f32 %v1877, %v696
        %v1879 = vsub.f32 %v1875, %v1878
        %v1880 = vmul.f32 %v1879, %v1879
        %1881 = vadd.xlane.f32.xlu0 %v1880
        %v1882 = vpop.xlane.xlu0 %1881
        %v1883 = vmul.f32 %v1882, %v696
        %v1884 = vadd.f32 %v1883, 1e-05
        %v1885 = vrsqrt.pop %v1884
        %v1886 = vmul.f32 %v1885, %v1884
        %v1887 = vmul.f32 %v1886, %v1885
        %v1888 = vmul.f32 0.5, %v1887
        %v1889 = vsub.f32 1.5, %v1888
        %v1890 = vmul.f32 %v1885, %v1889
        %vm1891 = vweird.f32 %v1884
        %vm1892 = vweird.f32 %v1885
        %vm1893 = vmor %vm1891, %vm1892
        %v1894 = vsel %vm1893, %v1885, %v1890
        %v1895 = vmul.f32 %v1879, %v1894
        %v1896 = vperm.slane %v490, 6
        %v1897 = vmul.f32 %v1895, %v1896
        %v1898 = vperm.slane %v490, 7
        %v1899 = vadd.f32 %v1897, %v1898
        %1900 = vst [vmem:[%s488] sm:$0xff] %v1899
        %s1901 = sand.u32 %s267, 1
        %s1902 = scalar_lea.sflag [#allocation5], %s1901
        %s1903 = sand.u32 %s267, 1
        %s1904 = smul.addr %s1903, 8
        %s1905 = scalar_lea.vmem [#allocation15], %s1904
        // Predicated region
        $region93: #{tpu_custom_call.1} parent=59 // pred_check
          %p1906 = pneg %p277
        $region94: #{tpu_custom_call.1} parent=59 // pred_check_branch
          %1908 = sbr.rel (%p1906) target = $region96
        $region95: #{tpu_custom_call.1} parent=59 // pred_region
          %1910 = vsyncadd %s1902, 0
          %s1911 = smul.addr %s34, 2
          %s1912 = sadd.s32 %s35, %s1911
          %s1913 = smul.addr %s1912, 8
          %s1914 = scalar_lea.hbm %s10, %s1913
          %s1916 = sshll.u32 %s1905, 4
          %s1917 = int_to_ptr.vmem [resolvable:$true] %s1916
          %s1918 = sshll.u32 %s1914, 4
          %s1919 = int_to_ptr.hbm [resolvable:$true] %s1918
          %1921 = dma.vmem_to_hbm [thread:$0]  %s1917, 128, %s1919, %s1902
        $region96: #{tpu_custom_call.1} parent=59 // pred_fallthru
          _
      $region60: #{tpu_custom_call.1} parent=5 // pred_fallthru
        _
      %p1922 = scmp.le.s32.totalorder 2, %s25
      // Predicated region
      $region97: #{tpu_custom_call.1} parent=5 // pred_check
        %p1923 = pneg %p1922
      $region98: #{tpu_custom_call.1} parent=5 // pred_check_branch
        %1925 = sbr.rel (%p1923) target = $region100
      $region99: #{tpu_custom_call.1} parent=5 // pred_region
        %s1926 = ssub.s32 %s25, 2
        // Predicated region
        $region101: #{tpu_custom_call.1} parent=99 // pred_check
          %p1927 = pneg %p283
        $region102: #{tpu_custom_call.1} parent=99 // pred_check_branch
          %1929 = sbr.rel (%p1927) target = $region104
        $region103: #{tpu_custom_call.1} parent=99 // pred_region
          %s1930 = sand.u32 %s268, 1
          %s1931 = scalar_lea.sflag [#allocation5], %s1930
          %s1932 = sand.u32 %s268, 1
          %s1933 = smul.addr %s1932, 8
          %s1934 = scalar_lea.vmem [#allocation15], %s1933
          %1936 = dma.done %s1931, 128
        $region104: #{tpu_custom_call.1} parent=99 // pred_fallthru
          _
      $region100: #{tpu_custom_call.1} parent=5 // pred_fallthru
        _
    $region6: #{tpu_custom_call.1} parent=1 // loop_footer
      %s29 = sadd.s32 1, %s25
    $region7: #{tpu_custom_call.1} parent=1 // loop_footer_branch
      %24 = sbr.rel target = $region3
    $region8: #{tpu_custom_call.1} parent=1 // loop_exit
      _
    %1937 = vsyncpa [#allocation4], 1
    %s1938 = scalar_lea.sflag [#allocation4], 1
    %1939 = vsyncpa %s1938, 1
    %1940 = vsyncpa [#allocation7], 1
    %1941 = vsyncpa [#allocation10], 1
    %1942 = vsyncpa [#allocation13], 1
    %1943 = vsyncpa [#allocation5], 1
    %s1944 = scalar_lea.sflag [#allocation5], 1
    %1945 = vsyncpa %s1944, 1

</llo_original>
